<compile_context>
chip_gen: v7x
topology: tpu7x:2x2x1
jax: 0.10.0
libtpu: 0.0.40
codegen_flags: <defaults>
</compile_context>

<pallas_src>
import functools

import jax
import jax.numpy as jnp
from jax.experimental import pallas as pl
from jax.experimental.pallas import tpu as pltpu


def _stacked_rgcn_kernel(node_ref, rel_ref, adj_ref, *refs,
                         num_layers, num_relations):
    """Full stacked R-GCN forward for one batch element (grid axis = batch).

    node_ref : (1, N, E0)  bf16       rel_ref : (1, R, Rd)  f32
    adj_ref  : (1, R, N, N) bf16
    refs     : per layer (w_node (R,E_l,H_l), w_rel (R,Rd,H_l), bias (1,H_l)),
               followed by out_ref (1, N, H_last).
    """
    out_ref = refs[3 * num_layers]
    R = num_relations

    # Per-relation node degrees: one XLU reduce over the whole adjacency block.
    # Computed ONCE and reused by every layer (replaces adj_r @ broadcast(rel_r)).
    deg_all = jnp.sum(adj_ref[0].astype(jnp.float32), axis=-1,
                      keepdims=True)                              # (R, N, 1) f32

    x = node_ref[0].astype(jnp.float32)                           # (N, E0) f32

    for l in range(num_layers):                                   # static unroll
        w_node_ref = refs[3 * l]                                  # (R, E_l, H_l) f32
        w_rel_ref = refs[3 * l + 1]                               # (R, Rd, H_l)  f32
        bias_ref = refs[3 * l + 2]                                # (1, H_l)      f32
        in_dim = w_node_ref.shape[1]
        out_dim = w_node_ref.shape[2]
        n_rows = x.shape[0]

        # Static per-layer choice of matmul association.
        use_xw_first = out_dim < in_dim
        # bf16 cast of x only materialized when the (adj @ x) @ W path needs it.
        x_bf = None if use_xw_first else x.astype(jnp.bfloat16)

        acc = jnp.zeros((n_rows, out_dim), jnp.float32)

        for r in range(R):                                        # R is small
            adj_r = adj_ref[0, r]                                 # (N, N) bf16
            w_n = w_node_ref[r]                                   # (E_l, H_l) f32

            if use_xw_first:
                # adj @ (x @ W): the N x N matmul gets free dim H < E.
                xw = jnp.dot(x, w_n, preferred_element_type=jnp.float32)
                acc = acc + jnp.dot(adj_r, xw.astype(jnp.bfloat16),
                                    preferred_element_type=jnp.float32)
            else:
                # (adj @ x) @ W: the N x N matmul gets free dim E <= H.
                s = jnp.dot(adj_r, x_bf, preferred_element_type=jnp.float32)
                acc = acc + jnp.dot(s, w_n, preferred_element_type=jnp.float32)

            # Relation-feature contribution via the row-sum identity:
            #   adj_r @ broadcast(rel_r) @ W_rel == deg_r (x) (rel_r @ W_rel)
            rel_proj = jnp.dot(rel_ref[0, r:r + 1, :], w_rel_ref[r],
                               preferred_element_type=jnp.float32)    # (1, H_l)
            acc = acc + deg_all[r] * rel_proj                         # rank-1 VPU update

        # bias + ReLU fused; intermediate x never leaves the chip.
        x = jnp.maximum(acc + bias_ref[...], 0.0)

    out_ref[0] = x.astype(out_ref.dtype)      # single store of the final layer


def stacked_rgcn_forward(node, rel, adj, params):
    """params: list of (Wt, bias) per layer, Wt = (R*(E_l+Rd), H_l) transposed
    torch Linear weight.  dropout_rate=0, no highway, num_bases=0."""
    B, N, E0 = node.shape
    _, R, Rd = rel.shape
    L = len(params)

    # bf16 at the boundary: adjacency dominates HBM traffic; accumulation is f32.
    node_bf = node.astype(jnp.bfloat16)
    adj_bf = adj.astype(jnp.bfloat16)

    # Split each layer's flat weight into aligned per-relation blocks
    # (R, E_l, H_l) and (R, Rd, H_l) so the kernel never slices at unaligned
    # sublane offsets.
    layer_inputs, layer_specs, dims = [], [], []
    in_dim = E0
    for wt, b in params:
        K, H = wt.shape
        assert K == R * (in_dim + Rd)
        w3 = wt.reshape(R, in_dim + Rd, H)
        w_node = w3[:, :in_dim, :]                                 # (R, E_l, H_l)
        w_rel = w3[:, in_dim:, :]                                  # (R, Rd, H_l)
        layer_inputs += [w_node, w_rel, b.reshape(1, H)]
        layer_specs += [
            # Constant index maps -> Pallas fetches these small blocks once and
            # skips the DMA on subsequent grid steps (block index unchanged).
            pl.BlockSpec((R, in_dim, H), lambda bb: (0, 0, 0)),
            pl.BlockSpec((R, Rd, H), lambda bb: (0, 0, 0)),
            pl.BlockSpec((1, H), lambda bb: (0, 0)),
        ]
        dims.append((in_dim, H))
        in_dim = H
    H_last = dims[-1][1]

    kernel = functools.partial(_stacked_rgcn_kernel,
                               num_layers=L, num_relations=R)

    return pl.pallas_call(
        kernel,
        out_shape=jax.ShapeDtypeStruct((B, N, H_last), jnp.float32),
        grid=(B,),
        in_specs=[
            pl.BlockSpec((1, N, E0), lambda bb: (bb, 0, 0)),
            pl.BlockSpec((1, R, Rd), lambda bb: (bb, 0, 0)),
            pl.BlockSpec((1, R, N, N), lambda bb: (bb, 0, 0, 0)),
            *layer_specs,
        ],
        out_specs=pl.BlockSpec((1, N, H_last), lambda bb: (bb, 0, 0)),
        compiler_params=pltpu.CompilerParams(
            dimension_semantics=("parallel",)),
    )(node_bf, rel, adj_bf, *layer_inputs)


# ---------------- parameter init (deterministic, Xavier uniform like PyTorch) ----------------
def xavier_uniform_t(key, fan_in, fan_out):
    bound = (6.0 / (fan_in + fan_out)) ** 0.5
    # PyTorch Linear.weight is (out, in); we store it transposed (in, out).
    return jax.random.uniform(key, (fan_in, fan_out), jnp.float32, -bound, bound)


def make_params(key, entity_input_dim, relation_input_dim, num_relations, hidden_dims):
    params = []
    in_dim = entity_input_dim
    for h in hidden_dims:
        key, sub = jax.random.split(key)
        fan_in = (in_dim + relation_input_dim) * num_relations
        wt = xavier_uniform_t(sub, fan_in, h)
        b = jnp.zeros((h,), jnp.float32)
        params.append((wt, b))
        in_dim = h
    return params


# ---------------- pure-JAX reference (mirrors the PyTorch forward, fp32) ----------------
def ref_forward(node, rel, adj, params):
    x = node
    for wt, b in params:
        R = rel.shape[1]
        supports = []
        for r in range(R):
            rel_r = jnp.repeat(rel[:, r:r + 1, :], x.shape[1], axis=1)
            feat = jnp.concatenate([x, rel_r], axis=-1)
            supports.append(jnp.einsum('bnm,bmk->bnk', adj[:, r], feat))
        supports = jnp.concatenate(supports, axis=-1)
        x = jnp.maximum(supports @ wt + b, 0.0)
    return x


if __name__ == "__main__":
    B, N, E, Rd, R = 2, 16, 8, 4, 3
    hidden_dims = [32, 32]

    key = jax.random.PRNGKey(0)
    k1, k2, k3, k4 = jax.random.split(key, 4)

    node = jax.random.normal(k1, (B, N, E), jnp.float32)
    rel = jax.random.normal(k2, (B, R, Rd), jnp.float32)
    adj = jax.random.uniform(k3, (B, R, N, N), jnp.float32)  # non-negative adjacency

    params = make_params(k4, E, Rd, R, hidden_dims)

    out = stacked_rgcn_forward(node, rel, adj, params)
    out = jax.block_until_ready(out)

    ref = ref_forward(node, rel, adj, params)
    assert out.shape == (B, N, hidden_dims[-1])
    # bf16 adjacency/features with f32 accumulation -> compare with a relative
    # Frobenius-norm check against the fp32 reference (expected ~5e-3).
    rel_err = float(jnp.linalg.norm(out - ref) / jnp.linalg.norm(ref))
    assert rel_err < 2e-2, rel_err

    print("KERNEL_OK")
</pallas_src>

<mosaic_0001>
module attributes {stable_mosaic.version = 11 : i64} {
  func.func @_stacked_rgcn_kernel(%arg0: i32, %arg1: memref<1x16x8xbf16, #tpu.memory_space<vmem>>, %arg2: memref<1x3x4xf32, #tpu.memory_space<vmem>>, %arg3: memref<1x3x16x16xbf16, #tpu.memory_space<vmem>>, %arg4: memref<3x8x32xf32, #tpu.memory_space<vmem>>, %arg5: memref<3x4x32xf32, #tpu.memory_space<vmem>>, %arg6: memref<1x32xf32, #tpu.memory_space<vmem>>, %arg7: memref<3x32x32xf32, #tpu.memory_space<vmem>>, %arg8: memref<3x4x32xf32, #tpu.memory_space<vmem>>, %arg9: memref<1x32xf32, #tpu.memory_space<vmem>>, %arg10: memref<1x16x32xf32, #tpu.memory_space<vmem>>) attributes {dimension_semantics = [#tpu.dimension_semantics<parallel>], iteration_bounds = array<i64: 2>, scalar_prefetch = 0 : i64, scratch_operands = 0 : i64, tpu.core_type = #tpu.core_type<tc>, window_params = [{transform_indices = @transform_0, window_bounds = array<i64: 1, 16, 8>}, {transform_indices = @transform_1, window_bounds = array<i64: 1, 3, 4>}, {transform_indices = @transform_2, window_bounds = array<i64: 1, 3, 16, 16>}, {pipeline_mode = #tpu.pipeline_mode<synchronous>, transform_indices = @transform_3, window_bounds = array<i64: 3, 8, 32>}, {pipeline_mode = #tpu.pipeline_mode<synchronous>, transform_indices = @transform_4, window_bounds = array<i64: 3, 4, 32>}, {pipeline_mode = #tpu.pipeline_mode<synchronous>, transform_indices = @transform_5, window_bounds = array<i64: 1, 32>}, {pipeline_mode = #tpu.pipeline_mode<synchronous>, transform_indices = @transform_6, window_bounds = array<i64: 3, 32, 32>}, {pipeline_mode = #tpu.pipeline_mode<synchronous>, transform_indices = @transform_7, window_bounds = array<i64: 3, 4, 32>}, {pipeline_mode = #tpu.pipeline_mode<synchronous>, transform_indices = @transform_8, window_bounds = array<i64: 1, 32>}, {transform_indices = @transform_9, window_bounds = array<i64: 1, 16, 32>}]} {
    %c0 = arith.constant 0 : index
    %c0_0 = arith.constant 0 : index
    %c0_1 = arith.constant 0 : index
    %c0_2 = arith.constant 0 : index
    %0 = vector.load %arg3[%c0, %c0_0, %c0_1, %c0_2] : memref<1x3x16x16xbf16, #tpu.memory_space<vmem>>, vector<1x3x16x16xbf16>
    %1 = vector.shape_cast %0 : vector<1x3x16x16xbf16> to vector<3x16x16xbf16>
    %2 = arith.extf %1 : vector<3x16x16xbf16> to vector<3x16x16xf32>
    %cst = arith.constant dense<0.000000e+00> : vector<3x16xf32>
    %3 = vector.multi_reduction <add>, %2, %cst [2] : vector<3x16x16xf32> to vector<3x16xf32>
    %4 = vector.shape_cast %3 : vector<3x16xf32> to vector<3x16x1xf32>
    %c0_3 = arith.constant 0 : index
    %c0_4 = arith.constant 0 : index
    %c0_5 = arith.constant 0 : index
    %5 = vector.load %arg1[%c0_3, %c0_4, %c0_5] : memref<1x16x8xbf16, #tpu.memory_space<vmem>>, vector<1x16x8xbf16>
    %6 = vector.shape_cast %5 : vector<1x16x8xbf16> to vector<16x8xbf16>
    %7 = arith.extf %6 : vector<16x8xbf16> to vector<16x8xf32>
    %8 = arith.truncf %7 : vector<16x8xf32> to vector<16x8xbf16>
    %cst_6 = arith.constant 0.000000e+00 : f32
    %9 = vector.broadcast %cst_6 : f32 to vector<16x32xf32>
    %c0_7 = arith.constant 0 : index
    %c0_8 = arith.constant 0 : index
    %c0_9 = arith.constant 0 : index
    %c0_10 = arith.constant 0 : index
    %10 = vector.load %arg3[%c0_7, %c0_8, %c0_9, %c0_10] : memref<1x3x16x16xbf16, #tpu.memory_space<vmem>>, vector<1x1x16x16xbf16>
    %11 = vector.shape_cast %10 : vector<1x1x16x16xbf16> to vector<16x16xbf16>
    %c0_11 = arith.constant 0 : index
    %c0_12 = arith.constant 0 : index
    %c0_13 = arith.constant 0 : index
    %12 = vector.load %arg4[%c0_11, %c0_12, %c0_13] : memref<3x8x32xf32, #tpu.memory_space<vmem>>, vector<1x8x32xf32>
    %13 = vector.shape_cast %12 : vector<1x8x32xf32> to vector<8x32xf32>
    %cst_14 = arith.constant dense<0.000000e+00> : vector<16x8xf32>
    %14 = tpu.matmul %11, %8, %cst_14 {dimension_numbers = #tpu.dot_dimension_numbers<[1], [0], [0], [1], [0, 0, 1, 1], [], []>} : vector<16x16xbf16>, vector<16x8xbf16>, vector<16x8xf32> -> vector<16x8xf32>
    %cst_15 = arith.constant dense<0.000000e+00> : vector<16x32xf32>
    %15 = tpu.matmul %14, %13, %cst_15 {dimension_numbers = #tpu.dot_dimension_numbers<[1], [0], [0], [1], [0, 0, 1, 1], [], []>} : vector<16x8xf32>, vector<8x32xf32>, vector<16x32xf32> -> vector<16x32xf32>
    %16 = arith.addf %9, %15 : vector<16x32xf32>
    %c0_16 = arith.constant 0 : index
    %c0_17 = arith.constant 0 : index
    %c0_18 = arith.constant 0 : index
    %17 = vector.load %arg2[%c0_16, %c0_17, %c0_18] : memref<1x3x4xf32, #tpu.memory_space<vmem>>, vector<1x1x4xf32>
    %18 = vector.shape_cast %17 : vector<1x1x4xf32> to vector<1x4xf32>
    %c0_19 = arith.constant 0 : index
    %c0_20 = arith.constant 0 : index
    %c0_21 = arith.constant 0 : index
    %19 = vector.load %arg5[%c0_19, %c0_20, %c0_21] : memref<3x4x32xf32, #tpu.memory_space<vmem>>, vector<1x4x32xf32>
    %20 = vector.shape_cast %19 : vector<1x4x32xf32> to vector<4x32xf32>
    %cst_22 = arith.constant dense<0.000000e+00> : vector<1x32xf32>
    %21 = tpu.matmul %18, %20, %cst_22 {dimension_numbers = #tpu.dot_dimension_numbers<[1], [0], [0], [1], [0, 0, 1, 1], [], []>} : vector<1x4xf32>, vector<4x32xf32>, vector<1x32xf32> -> vector<1x32xf32>
    %22 = vector.extract_strided_slice %4 {offsets = [0, 0, 0], sizes = [1, 16, 1], strides = [1, 1, 1]} : vector<3x16x1xf32> to vector<1x16x1xf32>
    %23 = vector.shape_cast %22 : vector<1x16x1xf32> to vector<16x1xf32>
    %24 = vector.broadcast %23 : vector<16x1xf32> to vector<16x32xf32>
    %25 = vector.broadcast %21 : vector<1x32xf32> to vector<16x32xf32>
    %26 = arith.mulf %24, %25 : vector<16x32xf32>
    %27 = arith.addf %16, %26 : vector<16x32xf32>
    %c0_23 = arith.constant 0 : index
    %c1 = arith.constant 1 : index
    %c0_24 = arith.constant 0 : index
    %c0_25 = arith.constant 0 : index
    %28 = vector.load %arg3[%c0_23, %c1, %c0_24, %c0_25] : memref<1x3x16x16xbf16, #tpu.memory_space<vmem>>, vector<1x1x16x16xbf16>
    %29 = vector.shape_cast %28 : vector<1x1x16x16xbf16> to vector<16x16xbf16>
    %c1_26 = arith.constant 1 : index
    %c0_27 = arith.constant 0 : index
    %c0_28 = arith.constant 0 : index
    %30 = vector.load %arg4[%c1_26, %c0_27, %c0_28] : memref<3x8x32xf32, #tpu.memory_space<vmem>>, vector<1x8x32xf32>
    %31 = vector.shape_cast %30 : vector<1x8x32xf32> to vector<8x32xf32>
    %cst_29 = arith.constant dense<0.000000e+00> : vector<16x8xf32>
    %32 = tpu.matmul %29, %8, %cst_29 {dimension_numbers = #tpu.dot_dimension_numbers<[1], [0], [0], [1], [0, 0, 1, 1], [], []>} : vector<16x16xbf16>, vector<16x8xbf16>, vector<16x8xf32> -> vector<16x8xf32>
    %cst_30 = arith.constant dense<0.000000e+00> : vector<16x32xf32>
    %33 = tpu.matmul %32, %31, %cst_30 {dimension_numbers = #tpu.dot_dimension_numbers<[1], [0], [0], [1], [0, 0, 1, 1], [], []>} : vector<16x8xf32>, vector<8x32xf32>, vector<16x32xf32> -> vector<16x32xf32>
    %34 = arith.addf %27, %33 : vector<16x32xf32>
    %c0_31 = arith.constant 0 : index
    %c1_32 = arith.constant 1 : index
    %c0_33 = arith.constant 0 : index
    %35 = vector.load %arg2[%c0_31, %c1_32, %c0_33] : memref<1x3x4xf32, #tpu.memory_space<vmem>>, vector<1x1x4xf32>
    %36 = vector.shape_cast %35 : vector<1x1x4xf32> to vector<1x4xf32>
    %c1_34 = arith.constant 1 : index
    %c0_35 = arith.constant 0 : index
    %c0_36 = arith.constant 0 : index
    %37 = vector.load %arg5[%c1_34, %c0_35, %c0_36] : memref<3x4x32xf32, #tpu.memory_space<vmem>>, vector<1x4x32xf32>
    %38 = vector.shape_cast %37 : vector<1x4x32xf32> to vector<4x32xf32>
    %cst_37 = arith.constant dense<0.000000e+00> : vector<1x32xf32>
    %39 = tpu.matmul %36, %38, %cst_37 {dimension_numbers = #tpu.dot_dimension_numbers<[1], [0], [0], [1], [0, 0, 1, 1], [], []>} : vector<1x4xf32>, vector<4x32xf32>, vector<1x32xf32> -> vector<1x32xf32>
    %40 = vector.extract_strided_slice %4 {offsets = [1, 0, 0], sizes = [1, 16, 1], strides = [1, 1, 1]} : vector<3x16x1xf32> to vector<1x16x1xf32>
    %41 = vector.shape_cast %40 : vector<1x16x1xf32> to vector<16x1xf32>
    %42 = vector.broadcast %41 : vector<16x1xf32> to vector<16x32xf32>
    %43 = vector.broadcast %39 : vector<1x32xf32> to vector<16x32xf32>
    %44 = arith.mulf %42, %43 : vector<16x32xf32>
    %45 = arith.addf %34, %44 : vector<16x32xf32>
    %c0_38 = arith.constant 0 : index
    %c2 = arith.constant 2 : index
    %c0_39 = arith.constant 0 : index
    %c0_40 = arith.constant 0 : index
    %46 = vector.load %arg3[%c0_38, %c2, %c0_39, %c0_40] : memref<1x3x16x16xbf16, #tpu.memory_space<vmem>>, vector<1x1x16x16xbf16>
    %47 = vector.shape_cast %46 : vector<1x1x16x16xbf16> to vector<16x16xbf16>
    %c2_41 = arith.constant 2 : index
    %c0_42 = arith.constant 0 : index
    %c0_43 = arith.constant 0 : index
    %48 = vector.load %arg4[%c2_41, %c0_42, %c0_43] : memref<3x8x32xf32, #tpu.memory_space<vmem>>, vector<1x8x32xf32>
    %49 = vector.shape_cast %48 : vector<1x8x32xf32> to vector<8x32xf32>
    %cst_44 = arith.constant dense<0.000000e+00> : vector<16x8xf32>
    %50 = tpu.matmul %47, %8, %cst_44 {dimension_numbers = #tpu.dot_dimension_numbers<[1], [0], [0], [1], [0, 0, 1, 1], [], []>} : vector<16x16xbf16>, vector<16x8xbf16>, vector<16x8xf32> -> vector<16x8xf32>
    %cst_45 = arith.constant dense<0.000000e+00> : vector<16x32xf32>
    %51 = tpu.matmul %50, %49, %cst_45 {dimension_numbers = #tpu.dot_dimension_numbers<[1], [0], [0], [1], [0, 0, 1, 1], [], []>} : vector<16x8xf32>, vector<8x32xf32>, vector<16x32xf32> -> vector<16x32xf32>
    %52 = arith.addf %45, %51 : vector<16x32xf32>
    %c0_46 = arith.constant 0 : index
    %c2_47 = arith.constant 2 : index
    %c0_48 = arith.constant 0 : index
    %53 = vector.load %arg2[%c0_46, %c2_47, %c0_48] : memref<1x3x4xf32, #tpu.memory_space<vmem>>, vector<1x1x4xf32>
    %54 = vector.shape_cast %53 : vector<1x1x4xf32> to vector<1x4xf32>
    %c2_49 = arith.constant 2 : index
    %c0_50 = arith.constant 0 : index
    %c0_51 = arith.constant 0 : index
    %55 = vector.load %arg5[%c2_49, %c0_50, %c0_51] : memref<3x4x32xf32, #tpu.memory_space<vmem>>, vector<1x4x32xf32>
    %56 = vector.shape_cast %55 : vector<1x4x32xf32> to vector<4x32xf32>
    %cst_52 = arith.constant dense<0.000000e+00> : vector<1x32xf32>
    %57 = tpu.matmul %54, %56, %cst_52 {dimension_numbers = #tpu.dot_dimension_numbers<[1], [0], [0], [1], [0, 0, 1, 1], [], []>} : vector<1x4xf32>, vector<4x32xf32>, vector<1x32xf32> -> vector<1x32xf32>
    %58 = vector.extract_strided_slice %4 {offsets = [2, 0, 0], sizes = [1, 16, 1], strides = [1, 1, 1]} : vector<3x16x1xf32> to vector<1x16x1xf32>
    %59 = vector.shape_cast %58 : vector<1x16x1xf32> to vector<16x1xf32>
    %60 = vector.broadcast %59 : vector<16x1xf32> to vector<16x32xf32>
    %61 = vector.broadcast %57 : vector<1x32xf32> to vector<16x32xf32>
    %62 = arith.mulf %60, %61 : vector<16x32xf32>
    %63 = arith.addf %52, %62 : vector<16x32xf32>
    %c0_53 = arith.constant 0 : index
    %c0_54 = arith.constant 0 : index
    %64 = vector.load %arg6[%c0_53, %c0_54] : memref<1x32xf32, #tpu.memory_space<vmem>>, vector<1x32xf32>
    %65 = vector.broadcast %64 : vector<1x32xf32> to vector<16x32xf32>
    %66 = arith.addf %63, %65 : vector<16x32xf32>
    %cst_55 = arith.constant 0.000000e+00 : f32
    %67 = vector.broadcast %cst_55 : f32 to vector<16x32xf32>
    %68 = arith.maximumf %66, %67 : vector<16x32xf32>
    %69 = arith.truncf %68 : vector<16x32xf32> to vector<16x32xbf16>
    %cst_56 = arith.constant 0.000000e+00 : f32
    %70 = vector.broadcast %cst_56 : f32 to vector<16x32xf32>
    %c0_57 = arith.constant 0 : index
    %c0_58 = arith.constant 0 : index
    %c0_59 = arith.constant 0 : index
    %c0_60 = arith.constant 0 : index
    %71 = vector.load %arg3[%c0_57, %c0_58, %c0_59, %c0_60] : memref<1x3x16x16xbf16, #tpu.memory_space<vmem>>, vector<1x1x16x16xbf16>
    %72 = vector.shape_cast %71 : vector<1x1x16x16xbf16> to vector<16x16xbf16>
    %c0_61 = arith.constant 0 : index
    %c0_62 = arith.constant 0 : index
    %c0_63 = arith.constant 0 : index
    %73 = vector.load %arg7[%c0_61, %c0_62, %c0_63] : memref<3x32x32xf32, #tpu.memory_space<vmem>>, vector<1x32x32xf32>
    %74 = vector.shape_cast %73 : vector<1x32x32xf32> to vector<32x32xf32>
    %cst_64 = arith.constant dense<0.000000e+00> : vector<16x32xf32>
    %75 = tpu.matmul %72, %69, %cst_64 {dimension_numbers = #tpu.dot_dimension_numbers<[1], [0], [0], [1], [0, 0, 1, 1], [], []>} : vector<16x16xbf16>, vector<16x32xbf16>, vector<16x32xf32> -> vector<16x32xf32>
    %cst_65 = arith.constant dense<0.000000e+00> : vector<16x32xf32>
    %76 = tpu.matmul %75, %74, %cst_65 {dimension_numbers = #tpu.dot_dimension_numbers<[1], [0], [0], [1], [0, 0, 1, 1], [], []>} : vector<16x32xf32>, vector<32x32xf32>, vector<16x32xf32> -> vector<16x32xf32>
    %77 = arith.addf %70, %76 : vector<16x32xf32>
    %c0_66 = arith.constant 0 : index
    %c0_67 = arith.constant 0 : index
    %c0_68 = arith.constant 0 : index
    %78 = vector.load %arg2[%c0_66, %c0_67, %c0_68] : memref<1x3x4xf32, #tpu.memory_space<vmem>>, vector<1x1x4xf32>
    %79 = vector.shape_cast %78 : vector<1x1x4xf32> to vector<1x4xf32>
    %c0_69 = arith.constant 0 : index
    %c0_70 = arith.constant 0 : index
    %c0_71 = arith.constant 0 : index
    %80 = vector.load %arg8[%c0_69, %c0_70, %c0_71] : memref<3x4x32xf32, #tpu.memory_space<vmem>>, vector<1x4x32xf32>
    %81 = vector.shape_cast %80 : vector<1x4x32xf32> to vector<4x32xf32>
    %cst_72 = arith.constant dense<0.000000e+00> : vector<1x32xf32>
    %82 = tpu.matmul %79, %81, %cst_72 {dimension_numbers = #tpu.dot_dimension_numbers<[1], [0], [0], [1], [0, 0, 1, 1], [], []>} : vector<1x4xf32>, vector<4x32xf32>, vector<1x32xf32> -> vector<1x32xf32>
    %83 = vector.extract_strided_slice %4 {offsets = [0, 0, 0], sizes = [1, 16, 1], strides = [1, 1, 1]} : vector<3x16x1xf32> to vector<1x16x1xf32>
    %84 = vector.shape_cast %83 : vector<1x16x1xf32> to vector<16x1xf32>
    %85 = vector.broadcast %84 : vector<16x1xf32> to vector<16x32xf32>
    %86 = vector.broadcast %82 : vector<1x32xf32> to vector<16x32xf32>
    %87 = arith.mulf %85, %86 : vector<16x32xf32>
    %88 = arith.addf %77, %87 : vector<16x32xf32>
    %c0_73 = arith.constant 0 : index
    %c1_74 = arith.constant 1 : index
    %c0_75 = arith.constant 0 : index
    %c0_76 = arith.constant 0 : index
    %89 = vector.load %arg3[%c0_73, %c1_74, %c0_75, %c0_76] : memref<1x3x16x16xbf16, #tpu.memory_space<vmem>>, vector<1x1x16x16xbf16>
    %90 = vector.shape_cast %89 : vector<1x1x16x16xbf16> to vector<16x16xbf16>
    %c1_77 = arith.constant 1 : index
    %c0_78 = arith.constant 0 : index
    %c0_79 = arith.constant 0 : index
    %91 = vector.load %arg7[%c1_77, %c0_78, %c0_79] : memref<3x32x32xf32, #tpu.memory_space<vmem>>, vector<1x32x32xf32>
    %92 = vector.shape_cast %91 : vector<1x32x32xf32> to vector<32x32xf32>
    %cst_80 = arith.constant dense<0.000000e+00> : vector<16x32xf32>
    %93 = tpu.matmul %90, %69, %cst_80 {dimension_numbers = #tpu.dot_dimension_numbers<[1], [0], [0], [1], [0, 0, 1, 1], [], []>} : vector<16x16xbf16>, vector<16x32xbf16>, vector<16x32xf32> -> vector<16x32xf32>
    %cst_81 = arith.constant dense<0.000000e+00> : vector<16x32xf32>
    %94 = tpu.matmul %93, %92, %cst_81 {dimension_numbers = #tpu.dot_dimension_numbers<[1], [0], [0], [1], [0, 0, 1, 1], [], []>} : vector<16x32xf32>, vector<32x32xf32>, vector<16x32xf32> -> vector<16x32xf32>
    %95 = arith.addf %88, %94 : vector<16x32xf32>
    %c0_82 = arith.constant 0 : index
    %c1_83 = arith.constant 1 : index
    %c0_84 = arith.constant 0 : index
    %96 = vector.load %arg2[%c0_82, %c1_83, %c0_84] : memref<1x3x4xf32, #tpu.memory_space<vmem>>, vector<1x1x4xf32>
    %97 = vector.shape_cast %96 : vector<1x1x4xf32> to vector<1x4xf32>
    %c1_85 = arith.constant 1 : index
    %c0_86 = arith.constant 0 : index
    %c0_87 = arith.constant 0 : index
    %98 = vector.load %arg8[%c1_85, %c0_86, %c0_87] : memref<3x4x32xf32, #tpu.memory_space<vmem>>, vector<1x4x32xf32>
    %99 = vector.shape_cast %98 : vector<1x4x32xf32> to vector<4x32xf32>
    %cst_88 = arith.constant dense<0.000000e+00> : vector<1x32xf32>
    %100 = tpu.matmul %97, %99, %cst_88 {dimension_numbers = #tpu.dot_dimension_numbers<[1], [0], [0], [1], [0, 0, 1, 1], [], []>} : vector<1x4xf32>, vector<4x32xf32>, vector<1x32xf32> -> vector<1x32xf32>
    %101 = vector.extract_strided_slice %4 {offsets = [1, 0, 0], sizes = [1, 16, 1], strides = [1, 1, 1]} : vector<3x16x1xf32> to vector<1x16x1xf32>
    %102 = vector.shape_cast %101 : vector<1x16x1xf32> to vector<16x1xf32>
    %103 = vector.broadcast %102 : vector<16x1xf32> to vector<16x32xf32>
    %104 = vector.broadcast %100 : vector<1x32xf32> to vector<16x32xf32>
    %105 = arith.mulf %103, %104 : vector<16x32xf32>
    %106 = arith.addf %95, %105 : vector<16x32xf32>
    %c0_89 = arith.constant 0 : index
    %c2_90 = arith.constant 2 : index
    %c0_91 = arith.constant 0 : index
    %c0_92 = arith.constant 0 : index
    %107 = vector.load %arg3[%c0_89, %c2_90, %c0_91, %c0_92] : memref<1x3x16x16xbf16, #tpu.memory_space<vmem>>, vector<1x1x16x16xbf16>
    %108 = vector.shape_cast %107 : vector<1x1x16x16xbf16> to vector<16x16xbf16>
    %c2_93 = arith.constant 2 : index
    %c0_94 = arith.constant 0 : index
    %c0_95 = arith.constant 0 : index
    %109 = vector.load %arg7[%c2_93, %c0_94, %c0_95] : memref<3x32x32xf32, #tpu.memory_space<vmem>>, vector<1x32x32xf32>
    %110 = vector.shape_cast %109 : vector<1x32x32xf32> to vector<32x32xf32>
    %cst_96 = arith.constant dense<0.000000e+00> : vector<16x32xf32>
    %111 = tpu.matmul %108, %69, %cst_96 {dimension_numbers = #tpu.dot_dimension_numbers<[1], [0], [0], [1], [0, 0, 1, 1], [], []>} : vector<16x16xbf16>, vector<16x32xbf16>, vector<16x32xf32> -> vector<16x32xf32>
    %cst_97 = arith.constant dense<0.000000e+00> : vector<16x32xf32>
    %112 = tpu.matmul %111, %110, %cst_97 {dimension_numbers = #tpu.dot_dimension_numbers<[1], [0], [0], [1], [0, 0, 1, 1], [], []>} : vector<16x32xf32>, vector<32x32xf32>, vector<16x32xf32> -> vector<16x32xf32>
    %113 = arith.addf %106, %112 : vector<16x32xf32>
    %c0_98 = arith.constant 0 : index
    %c2_99 = arith.constant 2 : index
    %c0_100 = arith.constant 0 : index
    %114 = vector.load %arg2[%c0_98, %c2_99, %c0_100] : memref<1x3x4xf32, #tpu.memory_space<vmem>>, vector<1x1x4xf32>
    %115 = vector.shape_cast %114 : vector<1x1x4xf32> to vector<1x4xf32>
    %c2_101 = arith.constant 2 : index
    %c0_102 = arith.constant 0 : index
    %c0_103 = arith.constant 0 : index
    %116 = vector.load %arg8[%c2_101, %c0_102, %c0_103] : memref<3x4x32xf32, #tpu.memory_space<vmem>>, vector<1x4x32xf32>
    %117 = vector.shape_cast %116 : vector<1x4x32xf32> to vector<4x32xf32>
    %cst_104 = arith.constant dense<0.000000e+00> : vector<1x32xf32>
    %118 = tpu.matmul %115, %117, %cst_104 {dimension_numbers = #tpu.dot_dimension_numbers<[1], [0], [0], [1], [0, 0, 1, 1], [], []>} : vector<1x4xf32>, vector<4x32xf32>, vector<1x32xf32> -> vector<1x32xf32>
    %119 = vector.extract_strided_slice %4 {offsets = [2, 0, 0], sizes = [1, 16, 1], strides = [1, 1, 1]} : vector<3x16x1xf32> to vector<1x16x1xf32>
    %120 = vector.shape_cast %119 : vector<1x16x1xf32> to vector<16x1xf32>
    %121 = vector.broadcast %120 : vector<16x1xf32> to vector<16x32xf32>
    %122 = vector.broadcast %118 : vector<1x32xf32> to vector<16x32xf32>
    %123 = arith.mulf %121, %122 : vector<16x32xf32>
    %124 = arith.addf %113, %123 : vector<16x32xf32>
    %c0_105 = arith.constant 0 : index
    %c0_106 = arith.constant 0 : index
    %125 = vector.load %arg9[%c0_105, %c0_106] : memref<1x32xf32, #tpu.memory_space<vmem>>, vector<1x32xf32>
    %126 = vector.broadcast %125 : vector<1x32xf32> to vector<16x32xf32>
    %127 = arith.addf %124, %126 : vector<16x32xf32>
    %cst_107 = arith.constant 0.000000e+00 : f32
    %128 = vector.broadcast %cst_107 : f32 to vector<16x32xf32>
    %129 = arith.maximumf %127, %128 : vector<16x32xf32>
    %c0_108 = arith.constant 0 : index
    %c0_109 = arith.constant 0 : index
    %c0_110 = arith.constant 0 : index
    %130 = vector.load %arg10[%c0_108, %c0_109, %c0_110] : memref<1x16x32xf32, #tpu.memory_space<vmem>>, vector<1x16x32xf32>
    %131 = vector.shape_cast %130 : vector<1x16x32xf32> to vector<16x32xf32>
    %132 = vector.shape_cast %129 : vector<16x32xf32> to vector<1x16x32xf32>
    tpu.vector_store %arg10[%c0_108, %c0_109, %c0_110], %132 {strides = array<i32>} : memref<1x16x32xf32, #tpu.memory_space<vmem>>, vector<1x16x32xf32>,
    return
  }
  func.func @transform_0(%arg0: i32) -> (i32, i32, i32) {
    %c0_i32 = arith.constant 0 : i32
    %c0_i32_0 = arith.constant 0 : i32
    %c0_i32_1 = arith.constant 0 : i32
    return %arg0, %c0_i32, %c0_i32_0 : i32, i32, i32
  }
  func.func @transform_1(%arg0: i32) -> (i32, i32, i32) {
    %c0_i32 = arith.constant 0 : i32
    %c0_i32_0 = arith.constant 0 : i32
    %c0_i32_1 = arith.constant 0 : i32
    return %arg0, %c0_i32, %c0_i32_0 : i32, i32, i32
  }
  func.func @transform_2(%arg0: i32) -> (i32, i32, i32, i32) {
    %c0_i32 = arith.constant 0 : i32
    %c0_i32_0 = arith.constant 0 : i32
    %c0_i32_1 = arith.constant 0 : i32
    %c0_i32_2 = arith.constant 0 : i32
    return %arg0, %c0_i32, %c0_i32_0, %c0_i32_1 : i32, i32, i32, i32
  }
  func.func @transform_3(%arg0: i32) -> (i32, i32, i32) {
    %c0_i32 = arith.constant 0 : i32
    %c0_i32_0 = arith.constant 0 : i32
    %c0_i32_1 = arith.constant 0 : i32
    %c0_i32_2 = arith.constant 0 : i32
    return %c0_i32, %c0_i32_0, %c0_i32_1 : i32, i32, i32
  }
  func.func @transform_4(%arg0: i32) -> (i32, i32, i32) {
    %c0_i32 = arith.constant 0 : i32
    %c0_i32_0 = arith.constant 0 : i32
    %c0_i32_1 = arith.constant 0 : i32
    %c0_i32_2 = arith.constant 0 : i32
    return %c0_i32, %c0_i32_0, %c0_i32_1 : i32, i32, i32
  }
  func.func @transform_5(%arg0: i32) -> (i32, i32) {
    %c0_i32 = arith.constant 0 : i32
    %c0_i32_0 = arith.constant 0 : i32
    %c0_i32_1 = arith.constant 0 : i32
    return %c0_i32, %c0_i32_0 : i32, i32
  }
  func.func @transform_6(%arg0: i32) -> (i32, i32, i32) {
    %c0_i32 = arith.constant 0 : i32
    %c0_i32_0 = arith.constant 0 : i32
    %c0_i32_1 = arith.constant 0 : i32
    %c0_i32_2 = arith.constant 0 : i32
    return %c0_i32, %c0_i32_0, %c0_i32_1 : i32, i32, i32
  }
  func.func @transform_7(%arg0: i32) -> (i32, i32, i32) {
    %c0_i32 = arith.constant 0 : i32
    %c0_i32_0 = arith.constant 0 : i32
    %c0_i32_1 = arith.constant 0 : i32
    %c0_i32_2 = arith.constant 0 : i32
    return %c0_i32, %c0_i32_0, %c0_i32_1 : i32, i32, i32
  }
  func.func @transform_8(%arg0: i32) -> (i32, i32) {
    %c0_i32 = arith.constant 0 : i32
    %c0_i32_0 = arith.constant 0 : i32
    %c0_i32_1 = arith.constant 0 : i32
    return %c0_i32, %c0_i32_0 : i32, i32
  }
  func.func @transform_9(%arg0: i32) -> (i32, i32, i32) {
    %c0_i32 = arith.constant 0 : i32
    %c0_i32_0 = arith.constant 0 : i32
    %c0_i32_1 = arith.constant 0 : i32
    return %arg0, %c0_i32, %c0_i32_0 : i32, i32, i32
  }
}

</mosaic_0001>

<llo_original>
// kernel: tpu_custom_call.1
$region0: #{tpu_custom_call.1}
  #allocation0 [shape = 'u32[]', space=smem, size = 0x4, offset = 0x4, fixed_abs, tag = 'smem constant byte address 0x4 - core index']
  #allocation1 [shape = 'u32[144,128]{1,0:T(1,128)}', space=vmem, size = 0x12000, scoped, tag = 'internal scratch']
  %s0 = inlined_call_operand.vmem [shape: bf16[2,16,8], index: 0, kind: input, shape index: {}]
  %s1 = inlined_call_operand.vmem [shape: f32[2,3,4], index: 1, kind: input, shape index: {}]
  %s2 = inlined_call_operand.hbm [shape: bf16[2,3,16,16], index: 2, kind: input, shape index: {}]
  %s3 = inlined_call_operand.vmem [shape: f32[3,8,32], index: 3, kind: input, shape index: {}]
  %s4 = inlined_call_operand.vmem [shape: f32[3,4,32], index: 4, kind: input, shape index: {}]
  %s5 = inlined_call_operand.vmem [shape: f32[1,32], index: 5, kind: input, shape index: {}]
  %s6 = inlined_call_operand.hbm [shape: f32[3,32,32], index: 6, kind: input, shape index: {}]
  %s7 = inlined_call_operand.vmem [shape: f32[3,4,32], index: 7, kind: input, shape index: {}]
  %s8 = inlined_call_operand.vmem [shape: f32[1,32], index: 8, kind: input, shape index: {}]
  %s9 = inlined_call_operand.hbm [shape: f32[2,16,32], index: 9, kind: output, shape index: {}]
  %s10 = sld [smem:[#allocation0]]
  $region77: #{tpu_custom_call.1} parent=0
    _
  %s12 = ssub.s32 1, %s10
  %s13 = scalar_select 0, %s12, %s10
  $region1: #{tpu_custom_call.1} parent=0
    #allocation2 [shape = 'u8[24576]{0}', space=vmem, size = 0x6000, scoped, tag = 'input window, operand 2']
    #allocation3 [shape = 's32[2]{0}', space=sflag, size = 0x8, scoped, tag = 'scoped memory for tpu_custom_call.1']
    #allocation4 [shape = 's32[2]{0}', space=sflag, size = 0x8, scoped, tag = 'scoped memory for tpu_custom_call.1']
    #allocation5 [shape = 'u8[49152]{0}', space=vmem, size = 0xc000, scoped, tag = 'input window, operand 6, single buffered']
    #allocation6 [shape = 's32[1]{0}', space=sflag, size = 0x4, scoped, tag = 'scoped memory for tpu_custom_call.1']
    #allocation7 [shape = 'u8[16384]{0}', space=vmem, size = 0x4000, scoped, tag = 'output window, operand 0']
    %14 = vsyncpa [#allocation3], 0
    %s15 = scalar_lea.sflag [#allocation3], 1
    %16 = vsyncpa %s15, 0
    %17 = vsyncpa [#allocation6], 0
    %18 = vsyncpa [#allocation4], 0
    %s19 = scalar_lea.sflag [#allocation4], 1
    %20 = vsyncpa %s19, 0
    loop: start=0, step=1, limit=4
    $region2: #{tpu_custom_call.1} parent=1 // loop_pre_header
      _
    $region3: #{tpu_custom_call.1} parent=1 // loop_header
      %s22 = sphi 0, %s26
      %p23 = scmp.ge.s32.totalorder %s22, 4
      %s32 = sphi 0, %s34
      %s35 = sphi 0, %s32
      %s36 = sphi 0, %s35
      %s52 = sphi 0, %s36
      %s58 = sphi 0, %s60
      %s61 = sphi 0, %s58
      %s62 = sphi 0, %s61
      %s78 = sphi 0, %s62
      %s84 = sphi 0, %s86
      %s87 = sphi 0, %s84
      %s88 = sphi 0, %s87
      %s104 = sphi 0, %s88
      %s108 = sphi 0, %s108
      %s110 = sphi 0, %s108
      %s111 = sphi 0, %s110
      %s125 = sphi 0, %s111
      %s129 = sphi 0, %s129
      %s131 = sphi 0, %s129
      %s132 = sphi 0, %s131
      %s146 = sphi 0, %s132
      %s150 = sphi 0, %s150
      %s152 = sphi 0, %s150
      %s153 = sphi 0, %s152
      %s167 = sphi 0, %s153
      %s171 = sphi 0, %s171
      %s173 = sphi 0, %s171
      %s174 = sphi 0, %s173
      %s188 = sphi 0, %s174
      %s192 = sphi 0, %s192
      %s194 = sphi 0, %s192
      %s195 = sphi 0, %s194
      %s209 = sphi 0, %s195
      %s213 = sphi 0, %s213
      %s215 = sphi 0, %s213
      %s216 = sphi 0, %s215
      %s230 = sphi 0, %s216
      %s236 = sphi 0, %s238
      %s239 = sphi 0, %s236
      %s240 = sphi 0, %s239
      %s256 = sphi 0, %s240
    $region4: #{tpu_custom_call.1} parent=1 // loop_header_branch
      %25 = sbr.rel (%p23) target = $region8
    $region5: #{tpu_custom_call.1} parent=1 // loop_body
      %s27 = ssub.s32 %s22, 1
      %s28 = ssub.s32 %s22, 2
      %s29 = sadd.s32 %s22, 1
      %s30 = ssub.s32 %s22, %s29
      %p31 = scmp.eq.s32.totalorder %s30, 0
      %s33 = sadd.s32 %s32, 1
      %s34 = scalar_select %p31, %s32, %s33
      %p37 = pneg %p31
      %p38 = scmp.eq.s32.totalorder %s22, 1
      %p39 = por %p37, %p38
      %p40 = scmp.ne.s32.totalorder %s32, %s35
      %p41 = scmp.eq.s32.totalorder %s22, 0
      %p42 = por %p40, %p41
      %p43 = scmp.ne.s32.totalorder %s32, %s35
      %p44 = scmp.eq.s32.totalorder %s27, 1
      %p45 = por %p43, %p44
      %p46 = scmp.ne.s32.totalorder %s35, %s36
      %p47 = scmp.eq.s32.totalorder %s27, 0
      %p48 = por %p46, %p47
      %p49 = scmp.ne.s32.totalorder %s35, %s36
      %p50 = scmp.eq.s32.totalorder %s28, 1
      %p51 = por %p49, %p50
      %p53 = scmp.ne.s32.totalorder %s36, %s52
      %p54 = scmp.eq.s32.totalorder %s28, 0
      %p55 = por %p53, %p54
      %s56 = ssub.s32 %s22, %s29
      %p57 = scmp.eq.s32.totalorder %s56, 0
      %s59 = sadd.s32 %s58, 1
      %s60 = scalar_select %p57, %s58, %s59
      %p63 = pneg %p57
      %p64 = scmp.eq.s32.totalorder %s22, 1
      %p65 = por %p63, %p64
      %p66 = scmp.ne.s32.totalorder %s58, %s61
      %p67 = scmp.eq.s32.totalorder %s22, 0
      %p68 = por %p66, %p67
      %p69 = scmp.ne.s32.totalorder %s58, %s61
      %p70 = scmp.eq.s32.totalorder %s27, 1
      %p71 = por %p69, %p70
      %p72 = scmp.ne.s32.totalorder %s61, %s62
      %p73 = scmp.eq.s32.totalorder %s27, 0
      %p74 = por %p72, %p73
      %p75 = scmp.ne.s32.totalorder %s61, %s62
      %p76 = scmp.eq.s32.totalorder %s28, 1
      %p77 = por %p75, %p76
      %p79 = scmp.ne.s32.totalorder %s62, %s78
      %p80 = scmp.eq.s32.totalorder %s28, 0
      %p81 = por %p79, %p80
      %s82 = ssub.s32 %s22, %s29
      %p83 = scmp.eq.s32.totalorder %s82, 0
      %s85 = sadd.s32 %s84, 1
      %s86 = scalar_select %p83, %s84, %s85
      %p89 = pneg %p83
      %p90 = scmp.eq.s32.totalorder %s22, 1
      %p91 = por %p89, %p90
      %p92 = scmp.ne.s32.totalorder %s84, %s87
      %p93 = scmp.eq.s32.totalorder %s22, 0
      %p94 = por %p92, %p93
      %p95 = scmp.ne.s32.totalorder %s84, %s87
      %p96 = scmp.eq.s32.totalorder %s27, 1
      %p97 = por %p95, %p96
      %p98 = scmp.ne.s32.totalorder %s87, %s88
      %p99 = scmp.eq.s32.totalorder %s27, 0
      %p100 = por %p98, %p99
      %p101 = scmp.ne.s32.totalorder %s87, %s88
      %p102 = scmp.eq.s32.totalorder %s28, 1
      %p103 = por %p101, %p102
      %p105 = scmp.ne.s32.totalorder %s88, %s104
      %p106 = scmp.eq.s32.totalorder %s28, 0
      %p107 = por %p105, %p106
      %s109 = sadd.s32 %s108, 1
      %p112 = scmp.eq.s32.totalorder %s22, 1
      %p113 = scmp.ne.s32.totalorder %s108, %s110
      %p114 = scmp.eq.s32.totalorder %s22, 0
      %p115 = por %p113, %p114
      %p116 = scmp.ne.s32.totalorder %s108, %s110
      %p117 = scmp.eq.s32.totalorder %s27, 1
      %p118 = por %p116, %p117
      %p119 = scmp.ne.s32.totalorder %s110, %s111
      %p120 = scmp.eq.s32.totalorder %s27, 0
      %p121 = por %p119, %p120
      %p122 = scmp.ne.s32.totalorder %s110, %s111
      %p123 = scmp.eq.s32.totalorder %s28, 1
      %p124 = por %p122, %p123
      %p126 = scmp.ne.s32.totalorder %s111, %s125
      %p127 = scmp.eq.s32.totalorder %s28, 0
      %p128 = por %p126, %p127
      %s130 = sadd.s32 %s129, 1
      %p133 = scmp.eq.s32.totalorder %s22, 1
      %p134 = scmp.ne.s32.totalorder %s129, %s131
      %p135 = scmp.eq.s32.totalorder %s22, 0
      %p136 = por %p134, %p135
      %p137 = scmp.ne.s32.totalorder %s129, %s131
      %p138 = scmp.eq.s32.totalorder %s27, 1
      %p139 = por %p137, %p138
      %p140 = scmp.ne.s32.totalorder %s131, %s132
      %p141 = scmp.eq.s32.totalorder %s27, 0
      %p142 = por %p140, %p141
      %p143 = scmp.ne.s32.totalorder %s131, %s132
      %p144 = scmp.eq.s32.totalorder %s28, 1
      %p145 = por %p143, %p144
      %p147 = scmp.ne.s32.totalorder %s132, %s146
      %p148 = scmp.eq.s32.totalorder %s28, 0
      %p149 = por %p147, %p148
      %s151 = sadd.s32 %s150, 1
      %p154 = scmp.eq.s32.totalorder %s22, 1
      %p155 = scmp.ne.s32.totalorder %s150, %s152
      %p156 = scmp.eq.s32.totalorder %s22, 0
      %p157 = por %p155, %p156
      %p158 = scmp.ne.s32.totalorder %s150, %s152
      %p159 = scmp.eq.s32.totalorder %s27, 1
      %p160 = por %p158, %p159
      %p161 = scmp.ne.s32.totalorder %s152, %s153
      %p162 = scmp.eq.s32.totalorder %s27, 0
      %p163 = por %p161, %p162
      %p164 = scmp.ne.s32.totalorder %s152, %s153
      %p165 = scmp.eq.s32.totalorder %s28, 1
      %p166 = por %p164, %p165
      %p168 = scmp.ne.s32.totalorder %s153, %s167
      %p169 = scmp.eq.s32.totalorder %s28, 0
      %p170 = por %p168, %p169
      %s172 = sadd.s32 %s171, 1
      %p175 = scmp.eq.s32.totalorder %s22, 1
      %p176 = scmp.ne.s32.totalorder %s171, %s173
      %p177 = scmp.eq.s32.totalorder %s22, 0
      %p178 = por %p176, %p177
      %p179 = scmp.ne.s32.totalorder %s171, %s173
      %p180 = scmp.eq.s32.totalorder %s27, 1
      %p181 = por %p179, %p180
      %p182 = scmp.ne.s32.totalorder %s173, %s174
      %p183 = scmp.eq.s32.totalorder %s27, 0
      %p184 = por %p182, %p183
      %p185 = scmp.ne.s32.totalorder %s173, %s174
      %p186 = scmp.eq.s32.totalorder %s28, 1
      %p187 = por %p185, %p186
      %p189 = scmp.ne.s32.totalorder %s174, %s188
      %p190 = scmp.eq.s32.totalorder %s28, 0
      %p191 = por %p189, %p190
      %s193 = sadd.s32 %s192, 1
      %p196 = scmp.eq.s32.totalorder %s22, 1
      %p197 = scmp.ne.s32.totalorder %s192, %s194
      %p198 = scmp.eq.s32.totalorder %s22, 0
      %p199 = por %p197, %p198
      %p200 = scmp.ne.s32.totalorder %s192, %s194
      %p201 = scmp.eq.s32.totalorder %s27, 1
      %p202 = por %p200, %p201
      %p203 = scmp.ne.s32.totalorder %s194, %s195
      %p204 = scmp.eq.s32.totalorder %s27, 0
      %p205 = por %p203, %p204
      %p206 = scmp.ne.s32.totalorder %s194, %s195
      %p207 = scmp.eq.s32.totalorder %s28, 1
      %p208 = por %p206, %p207
      %p210 = scmp.ne.s32.totalorder %s195, %s209
      %p211 = scmp.eq.s32.totalorder %s28, 0
      %p212 = por %p210, %p211
      %s214 = sadd.s32 %s213, 1
      %p217 = scmp.eq.s32.totalorder %s22, 1
      %p218 = scmp.ne.s32.totalorder %s213, %s215
      %p219 = scmp.eq.s32.totalorder %s22, 0
      %p220 = por %p218, %p219
      %p221 = scmp.ne.s32.totalorder %s213, %s215
      %p222 = scmp.eq.s32.totalorder %s27, 1
      %p223 = por %p221, %p222
      %p224 = scmp.ne.s32.totalorder %s215, %s216
      %p225 = scmp.eq.s32.totalorder %s27, 0
      %p226 = por %p224, %p225
      %p227 = scmp.ne.s32.totalorder %s215, %s216
      %p228 = scmp.eq.s32.totalorder %s28, 1
      %p229 = por %p227, %p228
      %p231 = scmp.ne.s32.totalorder %s216, %s230
      %p232 = scmp.eq.s32.totalorder %s28, 0
      %p233 = por %p231, %p232
      %s234 = ssub.s32 %s22, %s29
      %p235 = scmp.eq.s32.totalorder %s234, 0
      %s237 = sadd.s32 %s236, 1
      %s238 = scalar_select %p235, %s236, %s237
      %p241 = pneg %p235
      %p242 = scmp.eq.s32.totalorder %s22, 1
      %p243 = por %p241, %p242
      %p244 = scmp.ne.s32.totalorder %s236, %s239
      %p245 = scmp.eq.s32.totalorder %s22, 0
      %p246 = por %p244, %p245
      %p247 = scmp.ne.s32.totalorder %s236, %s239
      %p248 = scmp.eq.s32.totalorder %s27, 1
      %p249 = por %p247, %p248
      %p250 = scmp.ne.s32.totalorder %s239, %s240
      %p251 = scmp.eq.s32.totalorder %s27, 0
      %p252 = por %p250, %p251
      %p253 = scmp.ne.s32.totalorder %s239, %s240
      %p254 = scmp.eq.s32.totalorder %s28, 1
      %p255 = por %p253, %p254
      %p257 = scmp.ne.s32.totalorder %s240, %s256
      %p258 = scmp.eq.s32.totalorder %s28, 0
      %p259 = por %p257, %p258
      %p260 = scmp.le.s32.totalorder 1, %s22
      %p261 = scmp.lt.s32.totalorder %s22, 3
      %p262 = pnand %p260, %p261
      %p263 = pneg %p262
      // Predicated region
      $region9: #{tpu_custom_call.1} parent=5 // pred_check
        _
      $region10: #{tpu_custom_call.1} parent=5 // pred_check_branch
        %265 = sbr.rel (%p262) target = $region12
      $region11: #{tpu_custom_call.1} parent=5 // pred_region
        %s266 = ssub.s32 %s22, 1
        // Predicated region
        $region13: #{tpu_custom_call.1} parent=11 // pred_check
          %p267 = pneg %p121
        $region14: #{tpu_custom_call.1} parent=11 // pred_check_branch
          %269 = sbr.rel (%p267) target = $region16
        $region15: #{tpu_custom_call.1} parent=11 // pred_region
          _
        $region16: #{tpu_custom_call.1} parent=11 // pred_fallthru
          _
        // Predicated region
        $region17: #{tpu_custom_call.1} parent=11 // pred_check
          %p270 = pneg %p142
        $region18: #{tpu_custom_call.1} parent=11 // pred_check_branch
          %272 = sbr.rel (%p270) target = $region20
        $region19: #{tpu_custom_call.1} parent=11 // pred_region
          _
        $region20: #{tpu_custom_call.1} parent=11 // pred_fallthru
          _
        // Predicated region
        $region21: #{tpu_custom_call.1} parent=11 // pred_check
          %p273 = pneg %p163
        $region22: #{tpu_custom_call.1} parent=11 // pred_check_branch
          %275 = sbr.rel (%p273) target = $region24
        $region23: #{tpu_custom_call.1} parent=11 // pred_region
          _
        $region24: #{tpu_custom_call.1} parent=11 // pred_fallthru
          _
        // Predicated region
        $region25: #{tpu_custom_call.1} parent=11 // pred_check
          %p276 = pneg %p184
        $region26: #{tpu_custom_call.1} parent=11 // pred_check_branch
          %278 = sbr.rel (%p276) target = $region28
        $region27: #{tpu_custom_call.1} parent=11 // pred_region
          %s280 = ssub.s32 1536, 1536
          %281 = vsyncadd [#allocation6], %s280
          %s282 = sshll.u32 [#allocation5], 4
          %s283 = int_to_ptr.vmem [resolvable:$true] %s282
          %288 = dma.hbm_to_vmem [thread:$0]  %s6, 1536, %s283, [#allocation6], 128, 128, 8
        $region28: #{tpu_custom_call.1} parent=11 // pred_fallthru
          _
        // Predicated region
        $region29: #{tpu_custom_call.1} parent=11 // pred_check
          %p289 = pneg %p205
        $region30: #{tpu_custom_call.1} parent=11 // pred_check_branch
          %291 = sbr.rel (%p289) target = $region32
        $region31: #{tpu_custom_call.1} parent=11 // pred_region
          _
        $region32: #{tpu_custom_call.1} parent=11 // pred_fallthru
          _
        // Predicated region
        $region33: #{tpu_custom_call.1} parent=11 // pred_check
          %p292 = pneg %p226
        $region34: #{tpu_custom_call.1} parent=11 // pred_check_branch
          %294 = sbr.rel (%p292) target = $region36
        $region35: #{tpu_custom_call.1} parent=11 // pred_region
          _
        $region36: #{tpu_custom_call.1} parent=11 // pred_fallthru
          _
      $region12: #{tpu_custom_call.1} parent=5 // pred_fallthru
        _
      %p295 = scmp.lt.s32.totalorder %s22, 2
      // Predicated region
      $region37: #{tpu_custom_call.1} parent=5 // pred_check
        %p296 = pneg %p295
      $region38: #{tpu_custom_call.1} parent=5 // pred_check_branch
        %298 = sbr.rel (%p296) target = $region40
      $region39: #{tpu_custom_call.1} parent=5 // pred_region
        // Predicated region
        $region41: #{tpu_custom_call.1} parent=39 // pred_check
          %p299 = pneg %p42
        $region42: #{tpu_custom_call.1} parent=39 // pred_check_branch
          %301 = sbr.rel (%p299) target = $region44
        $region43: #{tpu_custom_call.1} parent=39 // pred_region
          %p302 = scmp.lt.s32.totalorder %s22, 1
          %s303 = scalar_select %p302, %s22, 1
          %s304 = smul.addr %s303, 2
          %s305 = smul.addr %s304, 4
          %s306 = scalar_lea.vmem %s0, %s305
        $region44: #{tpu_custom_call.1} parent=39 // pred_fallthru
          _
        // Predicated region
        $region45: #{tpu_custom_call.1} parent=39 // pred_check
          %p307 = pneg %p68
        $region46: #{tpu_custom_call.1} parent=39 // pred_check_branch
          %309 = sbr.rel (%p307) target = $region48
        $region47: #{tpu_custom_call.1} parent=39 // pred_region
          %p310 = scmp.lt.s32.totalorder %s22, 1
          %s311 = scalar_select %p310, %s22, 1
          %s312 = smul.addr %s311, 4
          %s313 = scalar_lea.vmem %s1, %s312
        $region48: #{tpu_custom_call.1} parent=39 // pred_fallthru
          _
        // Predicated region
        $region49: #{tpu_custom_call.1} parent=39 // pred_check
          %p314 = pneg %p94
        $region50: #{tpu_custom_call.1} parent=39 // pred_check_branch
          %316 = sbr.rel (%p314) target = $region52
        $region51: #{tpu_custom_call.1} parent=39 // pred_region
          %s317 = sand.u32 %s84, 1
          %s318 = scalar_lea.sflag [#allocation3], %s317
          %s319 = sand.u32 %s84, 1
          %s320 = smul.addr %s319, 24
          %s321 = scalar_lea.vmem [#allocation2], %s320
          %s323 = ssub.s32 384, 384
          %324 = vsyncadd %s318, %s323
          %s325 = smul.addr %s22, 6
          %s326 = smul.addr %s325, 64
          %s327 = scalar_lea.hbm %s2, %s326
          %s328 = sshll.u32 %s321, 4
          %s329 = int_to_ptr.vmem [resolvable:$true] %s328
          %334 = dma.hbm_to_vmem [thread:$0]  %s327, 384, %s329, %s318, 64, 64, 4
        $region52: #{tpu_custom_call.1} parent=39 // pred_fallthru
          _
      $region40: #{tpu_custom_call.1} parent=5 // pred_fallthru
        _
      %p335 = scmp.le.s32.totalorder 1, %s22
      %p336 = scmp.lt.s32.totalorder %s22, 3
      %p337 = pnand %p335, %p336
      %p338 = pneg %p337
      // Predicated region
      $region53: #{tpu_custom_call.1} parent=5 // pred_check
        _
      $region54: #{tpu_custom_call.1} parent=5 // pred_check_branch
        %340 = sbr.rel (%p337) target = $region56
      $region55: #{tpu_custom_call.1} parent=5 // pred_region
        %s341 = ssub.s32 %s22, 1
        %s342 = sand.u32 %s87, 1
        %s343 = scalar_lea.sflag [#allocation3], %s342
        %s344 = sand.u32 %s87, 1
        %s345 = smul.addr %s344, 24
        %s346 = scalar_lea.vmem [#allocation2], %s345
        // Predicated region
        $region57: #{tpu_custom_call.1} parent=55 // pred_check
          %p347 = pneg %p100
        $region58: #{tpu_custom_call.1} parent=55 // pred_check_branch
          %349 = sbr.rel (%p347) target = $region60
        $region59: #{tpu_custom_call.1} parent=55 // pred_region
          %350 = dma.done %s343, 384
        $region60: #{tpu_custom_call.1} parent=55 // pred_fallthru
          _
        // Predicated region
        $region61: #{tpu_custom_call.1} parent=55 // pred_check
          %p351 = pneg %p184
        $region62: #{tpu_custom_call.1} parent=55 // pred_check_branch
          %353 = sbr.rel (%p351) target = $region64
        $region63: #{tpu_custom_call.1} parent=55 // pred_region
          %354 = dma.done [#allocation6], 1536
        $region64: #{tpu_custom_call.1} parent=55 // pred_fallthru
          _
        %p355 = scmp.lt.s32.totalorder %s27, 1
        %s356 = scalar_select %p355, %s27, 1
        %s357 = smul.addr %s356, 2
        %s358 = smul.addr %s357, 4
        %s359 = scalar_lea.vmem %s0, %s358
        %p360 = pneg %p48
        %p361 = pneg %p45
        %p362 = scmp.lt.s32.totalorder %s27, 1
        %s363 = scalar_select %p362, %s27, 1
        %s364 = smul.addr %s363, 4
        %s365 = scalar_lea.vmem %s1, %s364
        %p366 = pneg %p74
        %p367 = pneg %p71
        %s368 = sand.u32 %s87, 1
        %s369 = scalar_lea.sflag [#allocation3], %s368
        %s370 = sand.u32 %s87, 1
        %s371 = smul.addr %s370, 24
        %s372 = scalar_lea.vmem [#allocation2], %s371
        %p373 = pneg %p100
        %p374 = pneg %p97
        %p375 = pneg %p121
        %p376 = pneg %p118
        %p377 = pneg %p142
        %p378 = pneg %p139
        %p379 = pneg %p163
        %p380 = pneg %p160
        %p381 = pneg %p184
        %p382 = pneg %p181
        %p383 = pneg %p205
        %p384 = pneg %p202
        %p385 = pneg %p226
        %p386 = pneg %p223
        %p387 = pneg %p252
        %p388 = pneg %p249
        %s389 = sand.u32 %s239, 1
        %s390 = scalar_lea.sflag [#allocation4], %s389
        %s391 = sand.u32 %s239, 1
        %s392 = smul.addr %s391, 16
        %s393 = scalar_lea.vmem [#allocation7], %s392
        %p394 = scmp.lt.s32.totalorder %s27, 1
        %s395 = scalar_select %p394, %s27, 1
        %s396 = smul.addr %s395, 2
        %s397 = smul.addr %s396, 4
        %s398 = scalar_lea.vmem %s0, %s397
        %p399 = scmp.lt.s32.totalorder %s27, 1
        %s400 = scalar_select %p399, %s27, 1
        %s401 = smul.addr %s400, 4
        %s402 = scalar_lea.vmem %s1, %s401
        %v404 = vld [vmem:[%s346] sm:$0xf]
        %v405 = vld [vmem:[%s346 + $0x4] sm:$0xf]
        %v406 = vld [vmem:[%s346 + $0x8] sm:$0xf]
        %v407 = vld [vmem:[%s346 + $0xc] sm:$0xf]
        %v408 = vld [vmem:[%s346 + $0x10] sm:$0xf]
        %v409 = vld [vmem:[%s346 + $0x14] sm:$0xf]
        %v410 = vunpack.c.l.bf16 %v404
        %v411 = vunpack.c.l.bf16 %v405
        %v412 = vunpack.c.l.bf16 %v406
        %v413 = vunpack.c.l.bf16 %v407
        %v414 = vunpack.c.l.bf16 %v408
        %v415 = vunpack.c.l.bf16 %v409
        %vm416 = vcmask 130048
        %v417 = vsel %vm416, %v410, 0.0
        %418 = vadd.xlane.f32.xlu0 %v417
        %v419 = vpop.xlane.xlu0 %418
        %v420 = vsel %vm416, %v411, 0.0
        %421 = vadd.xlane.f32.xlu0 %v420
        %v422 = vpop.xlane.xlu0 %421
        %v423 = vsel %vm416, %v412, 0.0
        %424 = vadd.xlane.f32.xlu0 %v423
        %v425 = vpop.xlane.xlu0 %424
        %v426 = vsel %vm416, %v413, 0.0
        %427 = vadd.xlane.f32.xlu0 %v426
        %v428 = vpop.xlane.xlu0 %427
        %v429 = vsel %vm416, %v414, 0.0
        %430 = vadd.xlane.f32.xlu0 %v429
        %v431 = vpop.xlane.xlu0 %430
        %v432 = vsel %vm416, %v415, 0.0
        %433 = vadd.xlane.f32.xlu0 %v432
        %v434 = vpop.xlane.xlu0 %433
        %v435 = vld [vmem:[%s398] sm:$0xf]
        %v436 = vld [vmem:[%s398 + $0x4] sm:$0xf]
        %v437 = vld [vmem:[%s3] sm:$0xff]
        %v440 = vunpack.c.l.b16 %v404
        %v441 = vunpack.c.l.b16 %v405
        %v442 = vpack.c.b16 %v441, %v440
        %v445 = vunpack.c.l.b16 %v435
        %v446 = vunpack.c.l.b16 %v436
        %v447 = vpack.c.b16 %v446, %v445
        %v450 = vsel %vm416, %v442, 0
        %452 = vmatprep.subr.bf16.mxu0 0
        %453 = vmatpush1.bf16.msra.mxu0 %v447
        %454 = vmatprep.subr.bf16.mxu0 0
        %455 = vmatpush1.bf16.msra.mxu0 0
        %456 = vmatprep.subr.bf16.mxu0 0
        %457 = vmatpush1.bf16.msra.mxu0 0
        %458 = vmatprep.subr.bf16.mxu0 0
        %459 = vmatpush1.bf16.msra.mxu0 0
        %460 = vmatprep.subr.bf16.mxu0 0
        %461 = vmatpush1.bf16.msra.mxu0 0
        %462 = vmatprep.subr.bf16.mxu0 0
        %463 = vmatpush1.bf16.msra.mxu0 0
        %464 = vmatprep.subr.bf16.mxu0 0
        %465 = vmatpush1.bf16.msra.mxu0 0
        %466 = vmatprep.subr.bf16.mxu0 0
        %467 = vmatpush1.bf16.msra.mxu0 0
        %468 = vmatprep.subr.bf16.mxu0 0
        %469 = vmatpush1.bf16.msra.mxu0 0
        %470 = vmatprep.subr.bf16.mxu0 0
        %471 = vmatpush1.bf16.msra.mxu0 0
        %472 = vmatprep.subr.bf16.mxu0 0
        %473 = vmatpush1.bf16.msra.mxu0 0
        %474 = vmatprep.subr.bf16.mxu0 0
        %475 = vmatpush1.bf16.msra.mxu0 0
        %476 = vmatprep.subr.bf16.mxu0 0
        %477 = vmatpush1.bf16.msra.mxu0 0
        %478 = vmatprep.subr.bf16.mxu0 0
        %479 = vmatpush1.bf16.msra.mxu0 0
        %480 = vmatprep.subr.bf16.mxu0 0
        %481 = vmatpush1.bf16.msra.mxu0 0
        %482 = vmatprep.subr.bf16.mxu0 0
        %483 = vmatpush1.bf16.msra.mxu0 0
        %484 = vmatprep.mubr.bf16.mxu0 0
        %485 = vmatmul.mubr.bf16.gmra.mrb[0].mxu0 %v450
        %v486 = vpop.f32.mrb[0].mxu0
        %v487 = vadd.f32 0.0, %v486
        %v488 = vpop.f32.mrb[0].mxu0
        %v489 = vpop.f32.mrb[0].mxu0
        %v490 = vadd.f32 0.0, %v489
        %v491 = vpop.f32.mrb[0].mxu0
        %492 = vdwg.mxu0
        %v493 = vld [vmem:[%s402] sm:$0x1]
        %v494 = vld [vmem:[%s4] sm:$0xf]
        %vm495 = vcmask 31744
        %v497 = vsel %vm495, %v493, 0
        %vm499 = vcmask 1043456
        %v501 = vsel %vm499, %v494, 0
        %503 = vmatprep.subr.mxu0 0.0
        %504 = vmatpush1.msra.mxu0 %v501
        %505 = vmatprep.subr.mxu0 0.0
        %506 = vmatpush1.msra.mxu0 0.0
        %507 = vmatprep.subr.mxu0 0.0
        %508 = vmatpush1.msra.mxu0 0.0
        %509 = vmatprep.subr.mxu0 0.0
        %510 = vmatpush1.msra.mxu0 0.0
        %511 = vmatprep.subr.mxu0 0.0
        %512 = vmatpush1.msra.mxu0 0.0
        %513 = vmatprep.subr.mxu0 0.0
        %514 = vmatpush1.msra.mxu0 0.0
        %515 = vmatprep.subr.mxu0 0.0
        %516 = vmatpush1.msra.mxu0 0.0
        %517 = vmatprep.subr.mxu0 0.0
        %518 = vmatpush1.msra.mxu0 0.0
        %519 = vmatprep.subr.mxu0 0.0
        %520 = vmatpush1.msra.mxu0 0.0
        %521 = vmatprep.subr.mxu0 0.0
        %522 = vmatpush1.msra.mxu0 0.0
        %523 = vmatprep.subr.mxu0 0.0
        %524 = vmatpush1.msra.mxu0 0.0
        %525 = vmatprep.subr.mxu0 0.0
        %526 = vmatpush1.msra.mxu0 0.0
        %527 = vmatprep.subr.mxu0 0.0
        %528 = vmatpush1.msra.mxu0 0.0
        %529 = vmatprep.subr.mxu0 0.0
        %530 = vmatpush1.msra.mxu0 0.0
        %531 = vmatprep.subr.mxu0 0.0
        %532 = vmatpush1.msra.mxu0 0.0
        %533 = vmatprep.subr.mxu0 0.0
        %534 = vmatpush1.msra.mxu0 0.0
        %535 = vmatprep.subr.mxu0 0.0
        %536 = vmatpush1.msra.mxu0 0.0
        %537 = vmatprep.subr.mxu0 0.0
        %538 = vmatpush1.msra.mxu0 0.0
        %539 = vmatprep.subr.mxu0 0.0
        %540 = vmatpush1.msra.mxu0 0.0
        %541 = vmatprep.subr.mxu0 0.0
        %542 = vmatpush1.msra.mxu0 0.0
        %543 = vmatprep.subr.mxu0 0.0
        %544 = vmatpush1.msra.mxu0 0.0
        %545 = vmatprep.subr.mxu0 0.0
        %546 = vmatpush1.msra.mxu0 0.0
        %547 = vmatprep.subr.mxu0 0.0
        %548 = vmatpush1.msra.mxu0 0.0
        %549 = vmatprep.subr.mxu0 0.0
        %550 = vmatpush1.msra.mxu0 0.0
        %551 = vmatprep.subr.mxu0 0.0
        %552 = vmatpush1.msra.mxu0 0.0
        %553 = vmatprep.subr.mxu0 0.0
        %554 = vmatpush1.msra.mxu0 0.0
        %555 = vmatprep.subr.mxu0 0.0
        %556 = vmatpush1.msra.mxu0 0.0
        %557 = vmatprep.subr.mxu0 0.0
        %558 = vmatpush1.msra.mxu0 0.0
        %559 = vmatprep.subr.mxu0 0.0
        %560 = vmatpush1.msra.mxu0 0.0
        %561 = vmatprep.subr.mxu0 0.0
        %562 = vmatpush1.msra.mxu0 0.0
        %563 = vmatprep.subr.mxu0 0.0
        %564 = vmatpush1.msra.mxu0 0.0
        %565 = vmatprep.subr.mxu0 0.0
        %566 = vmatpush1.msra.mxu0 0.0
        %567 = vmatprep.mubr.f32.mxu0 0.0
        %568 = vmatmul.mubr.f32.gmra.mrb[0].mxu0 %v497
        %v569 = vpop.f32.mrb[0].mxu0
        %v570 = vadd.f32 0.0, %v569
        %v571 = vpop.f32.mrb[0].mxu0
        %572 = vdwg.mxu0
        %v573 = vlaneseq
        %v574 = vshrl.u32 %v573, 7
        %v575 = vsub.s32 0, %v574
        %v576 = vrot.slane %v570, %v575
        %v577 = vmul.f32 %v419, %v576
        %v578 = vmul.f32 %v422, %v576
        %vm579 = vcmask 64512
        %v581 = vsel %vm579, %v487, 0
        %v584 = vsel %vm579, %v490, 0
        %586 = vmatprep.subr.mxu0 0.0
        %587 = vmatpush1.msra.mxu0 %v437
        %588 = vmatprep.subr.mxu0 0.0
        %589 = vmatpush1.msra.mxu0 0.0
        %590 = vmatprep.subr.mxu0 0.0
        %591 = vmatpush1.msra.mxu0 0.0
        %592 = vmatprep.subr.mxu0 0.0
        %593 = vmatpush1.msra.mxu0 0.0
        %594 = vmatprep.subr.mxu0 0.0
        %595 = vmatpush1.msra.mxu0 0.0
        %596 = vmatprep.subr.mxu0 0.0
        %597 = vmatpush1.msra.mxu0 0.0
        %598 = vmatprep.subr.mxu0 0.0
        %599 = vmatpush1.msra.mxu0 0.0
        %600 = vmatprep.subr.mxu0 0.0
        %601 = vmatpush1.msra.mxu0 0.0
        %602 = vmatprep.subr.mxu0 0.0
        %603 = vmatpush1.msra.mxu0 0.0
        %604 = vmatprep.subr.mxu0 0.0
        %605 = vmatpush1.msra.mxu0 0.0
        %606 = vmatprep.subr.mxu0 0.0
        %607 = vmatpush1.msra.mxu0 0.0
        %608 = vmatprep.subr.mxu0 0.0
        %609 = vmatpush1.msra.mxu0 0.0
        %610 = vmatprep.subr.mxu0 0.0
        %611 = vmatpush1.msra.mxu0 0.0
        %612 = vmatprep.subr.mxu0 0.0
        %613 = vmatpush1.msra.mxu0 0.0
        %614 = vmatprep.subr.mxu0 0.0
        %615 = vmatpush1.msra.mxu0 0.0
        %616 = vmatprep.subr.mxu0 0.0
        %617 = vmatpush1.msra.mxu0 0.0
        %618 = vmatprep.subr.mxu0 0.0
        %619 = vmatpush1.msra.mxu0 0.0
        %620 = vmatprep.subr.mxu0 0.0
        %621 = vmatpush1.msra.mxu0 0.0
        %622 = vmatprep.subr.mxu0 0.0
        %623 = vmatpush1.msra.mxu0 0.0
        %624 = vmatprep.subr.mxu0 0.0
        %625 = vmatpush1.msra.mxu0 0.0
        %626 = vmatprep.subr.mxu0 0.0
        %627 = vmatpush1.msra.mxu0 0.0
        %628 = vmatprep.subr.mxu0 0.0
        %629 = vmatpush1.msra.mxu0 0.0
        %630 = vmatprep.subr.mxu0 0.0
        %631 = vmatpush1.msra.mxu0 0.0
        %632 = vmatprep.subr.mxu0 0.0
        %633 = vmatpush1.msra.mxu0 0.0
        %634 = vmatprep.subr.mxu0 0.0
        %635 = vmatpush1.msra.mxu0 0.0
        %636 = vmatprep.subr.mxu0 0.0
        %637 = vmatpush1.msra.mxu0 0.0
        %638 = vmatprep.subr.mxu0 0.0
        %639 = vmatpush1.msra.mxu0 0.0
        %640 = vmatprep.subr.mxu0 0.0
        %641 = vmatpush1.msra.mxu0 0.0
        %642 = vmatprep.subr.mxu0 0.0
        %643 = vmatpush1.msra.mxu0 0.0
        %644 = vmatprep.subr.mxu0 0.0
        %645 = vmatpush1.msra.mxu0 0.0
        %646 = vmatprep.subr.mxu0 0.0
        %647 = vmatpush1.msra.mxu0 0.0
        %648 = vmatprep.subr.mxu0 0.0
        %649 = vmatpush1.msra.mxu0 0.0
        %650 = vmatprep.mubr.f32.mxu0 0.0
        %651 = vmatmul.mubr.f32.gmra.mrb[0].mxu0 %v581
        %v652 = vpop.f32.mrb[0].mxu0
        %v653 = vadd.f32 %v577, %v652
        %v654 = vpop.f32.mrb[0].mxu0
        %655 = vmatprep.mubr.f32.mxu0 0.0
        %656 = vmatmul.mubr.f32.gmra.mrb[0].mxu0 %v584
        %v657 = vpop.f32.mrb[0].mxu0
        %v658 = vadd.f32 %v578, %v657
        %v659 = vpop.f32.mrb[0].mxu0
        %660 = vdwg.mxu0
        %s661 = scalar_lea.vmem %s346, 8 [#allocation2]
        %v662 = vld [vmem:[%s661] sm:$0xf]
        %v663 = vld [vmem:[%s661 + $0x4] sm:$0xf]
        %s664 = scalar_lea.vmem %s3, 8
        %v665 = vld [vmem:[%s664] sm:$0xff]
        %v668 = vunpack.c.l.b16 %v662
        %v669 = vunpack.c.l.b16 %v663
        %v670 = vpack.c.b16 %v669, %v668
        %v672 = vsel %vm416, %v670, 0
        %674 = vmatprep.subr.bf16.mxu0 0
        %675 = vmatpush1.bf16.msra.mxu0 %v447
        %676 = vmatprep.subr.bf16.mxu0 0
        %677 = vmatpush1.bf16.msra.mxu0 0
        %678 = vmatprep.subr.bf16.mxu0 0
        %679 = vmatpush1.bf16.msra.mxu0 0
        %680 = vmatprep.subr.bf16.mxu0 0
        %681 = vmatpush1.bf16.msra.mxu0 0
        %682 = vmatprep.subr.bf16.mxu0 0
        %683 = vmatpush1.bf16.msra.mxu0 0
        %684 = vmatprep.subr.bf16.mxu0 0
        %685 = vmatpush1.bf16.msra.mxu0 0
        %686 = vmatprep.subr.bf16.mxu0 0
        %687 = vmatpush1.bf16.msra.mxu0 0
        %688 = vmatprep.subr.bf16.mxu0 0
        %689 = vmatpush1.bf16.msra.mxu0 0
        %690 = vmatprep.subr.bf16.mxu0 0
        %691 = vmatpush1.bf16.msra.mxu0 0
        %692 = vmatprep.subr.bf16.mxu0 0
        %693 = vmatpush1.bf16.msra.mxu0 0
        %694 = vmatprep.subr.bf16.mxu0 0
        %695 = vmatpush1.bf16.msra.mxu0 0
        %696 = vmatprep.subr.bf16.mxu0 0
        %697 = vmatpush1.bf16.msra.mxu0 0
        %698 = vmatprep.subr.bf16.mxu0 0
        %699 = vmatpush1.bf16.msra.mxu0 0
        %700 = vmatprep.subr.bf16.mxu0 0
        %701 = vmatpush1.bf16.msra.mxu0 0
        %702 = vmatprep.subr.bf16.mxu0 0
        %703 = vmatpush1.bf16.msra.mxu0 0
        %704 = vmatprep.subr.bf16.mxu0 0
        %705 = vmatpush1.bf16.msra.mxu0 0
        %706 = vmatprep.mubr.bf16.mxu0 0
        %707 = vmatmul.mubr.bf16.gmra.mrb[0].mxu0 %v672
        %v708 = vpop.f32.mrb[0].mxu0
        %v709 = vadd.f32 0.0, %v708
        %v710 = vpop.f32.mrb[0].mxu0
        %v711 = vpop.f32.mrb[0].mxu0
        %v712 = vadd.f32 0.0, %v711
        %v713 = vpop.f32.mrb[0].mxu0
        %714 = vdwg.mxu0
        %v716 = vsel %vm579, %v709, 0
        %v719 = vsel %vm579, %v712, 0
        %721 = vmatprep.subr.mxu0 0.0
        %722 = vmatpush1.msra.mxu0 %v665
        %723 = vmatprep.subr.mxu0 0.0
        %724 = vmatpush1.msra.mxu0 0.0
        %725 = vmatprep.subr.mxu0 0.0
        %726 = vmatpush1.msra.mxu0 0.0
        %727 = vmatprep.subr.mxu0 0.0
        %728 = vmatpush1.msra.mxu0 0.0
        %729 = vmatprep.subr.mxu0 0.0
        %730 = vmatpush1.msra.mxu0 0.0
        %731 = vmatprep.subr.mxu0 0.0
        %732 = vmatpush1.msra.mxu0 0.0
        %733 = vmatprep.subr.mxu0 0.0
        %734 = vmatpush1.msra.mxu0 0.0
        %735 = vmatprep.subr.mxu0 0.0
        %736 = vmatpush1.msra.mxu0 0.0
        %737 = vmatprep.subr.mxu0 0.0
        %738 = vmatpush1.msra.mxu0 0.0
        %739 = vmatprep.subr.mxu0 0.0
        %740 = vmatpush1.msra.mxu0 0.0
        %741 = vmatprep.subr.mxu0 0.0
        %742 = vmatpush1.msra.mxu0 0.0
        %743 = vmatprep.subr.mxu0 0.0
        %744 = vmatpush1.msra.mxu0 0.0
        %745 = vmatprep.subr.mxu0 0.0
        %746 = vmatpush1.msra.mxu0 0.0
        %747 = vmatprep.subr.mxu0 0.0
        %748 = vmatpush1.msra.mxu0 0.0
        %749 = vmatprep.subr.mxu0 0.0
        %750 = vmatpush1.msra.mxu0 0.0
        %751 = vmatprep.subr.mxu0 0.0
        %752 = vmatpush1.msra.mxu0 0.0
        %753 = vmatprep.subr.mxu0 0.0
        %754 = vmatpush1.msra.mxu0 0.0
        %755 = vmatprep.subr.mxu0 0.0
        %756 = vmatpush1.msra.mxu0 0.0
        %757 = vmatprep.subr.mxu0 0.0
        %758 = vmatpush1.msra.mxu0 0.0
        %759 = vmatprep.subr.mxu0 0.0
        %760 = vmatpush1.msra.mxu0 0.0
        %761 = vmatprep.subr.mxu0 0.0
        %762 = vmatpush1.msra.mxu0 0.0
        %763 = vmatprep.subr.mxu0 0.0
        %764 = vmatpush1.msra.mxu0 0.0
        %765 = vmatprep.subr.mxu0 0.0
        %766 = vmatpush1.msra.mxu0 0.0
        %767 = vmatprep.subr.mxu0 0.0
        %768 = vmatpush1.msra.mxu0 0.0
        %769 = vmatprep.subr.mxu0 0.0
        %770 = vmatpush1.msra.mxu0 0.0
        %771 = vmatprep.subr.mxu0 0.0
        %772 = vmatpush1.msra.mxu0 0.0
        %773 = vmatprep.subr.mxu0 0.0
        %774 = vmatpush1.msra.mxu0 0.0
        %775 = vmatprep.subr.mxu0 0.0
        %776 = vmatpush1.msra.mxu0 0.0
        %777 = vmatprep.subr.mxu0 0.0
        %778 = vmatpush1.msra.mxu0 0.0
        %779 = vmatprep.subr.mxu0 0.0
        %780 = vmatpush1.msra.mxu0 0.0
        %781 = vmatprep.subr.mxu0 0.0
        %782 = vmatpush1.msra.mxu0 0.0
        %783 = vmatprep.subr.mxu0 0.0
        %784 = vmatpush1.msra.mxu0 0.0
        %785 = vmatprep.mubr.f32.mxu0 0.0
        %786 = vmatmul.mubr.f32.gmra.mrb[0].mxu0 %v716
        %v787 = vpop.f32.mrb[0].mxu0
        %v788 = vadd.f32 0.0, %v787
        %v789 = vpop.f32.mrb[0].mxu0
        %790 = vmatprep.mubr.f32.mxu0 0.0
        %791 = vmatmul.mubr.f32.gmra.mrb[0].mxu0 %v719
        %v792 = vpop.f32.mrb[0].mxu0
        %v793 = vadd.f32 0.0, %v792
        %v794 = vpop.f32.mrb[0].mxu0
        %795 = vdwg.mxu0
        %v796 = vadd.f32 %v653, %v788
        %v797 = vadd.f32 %v658, %v793
        %v798 = vld [vmem:[%s402 + $0x1] sm:$0x1]
        %s799 = scalar_lea.vmem %s4, 4
        %v800 = vld [vmem:[%s799] sm:$0xf]
        %v802 = vsel %vm495, %v798, 0
        %v805 = vsel %vm499, %v800, 0
        %807 = vmatprep.subr.mxu0 0.0
        %808 = vmatpush1.msra.mxu0 %v805
        %809 = vmatprep.subr.mxu0 0.0
        %810 = vmatpush1.msra.mxu0 0.0
        %811 = vmatprep.subr.mxu0 0.0
        %812 = vmatpush1.msra.mxu0 0.0
        %813 = vmatprep.subr.mxu0 0.0
        %814 = vmatpush1.msra.mxu0 0.0
        %815 = vmatprep.subr.mxu0 0.0
        %816 = vmatpush1.msra.mxu0 0.0
        %817 = vmatprep.subr.mxu0 0.0
        %818 = vmatpush1.msra.mxu0 0.0
        %819 = vmatprep.subr.mxu0 0.0
        %820 = vmatpush1.msra.mxu0 0.0
        %821 = vmatprep.subr.mxu0 0.0
        %822 = vmatpush1.msra.mxu0 0.0
        %823 = vmatprep.subr.mxu0 0.0
        %824 = vmatpush1.msra.mxu0 0.0
        %825 = vmatprep.subr.mxu0 0.0
        %826 = vmatpush1.msra.mxu0 0.0
        %827 = vmatprep.subr.mxu0 0.0
        %828 = vmatpush1.msra.mxu0 0.0
        %829 = vmatprep.subr.mxu0 0.0
        %830 = vmatpush1.msra.mxu0 0.0
        %831 = vmatprep.subr.mxu0 0.0
        %832 = vmatpush1.msra.mxu0 0.0
        %833 = vmatprep.subr.mxu0 0.0
        %834 = vmatpush1.msra.mxu0 0.0
        %835 = vmatprep.subr.mxu0 0.0
        %836 = vmatpush1.msra.mxu0 0.0
        %837 = vmatprep.subr.mxu0 0.0
        %838 = vmatpush1.msra.mxu0 0.0
        %839 = vmatprep.subr.mxu0 0.0
        %840 = vmatpush1.msra.mxu0 0.0
        %841 = vmatprep.subr.mxu0 0.0
        %842 = vmatpush1.msra.mxu0 0.0
        %843 = vmatprep.subr.mxu0 0.0
        %844 = vmatpush1.msra.mxu0 0.0
        %845 = vmatprep.subr.mxu0 0.0
        %846 = vmatpush1.msra.mxu0 0.0
        %847 = vmatprep.subr.mxu0 0.0
        %848 = vmatpush1.msra.mxu0 0.0
        %849 = vmatprep.subr.mxu0 0.0
        %850 = vmatpush1.msra.mxu0 0.0
        %851 = vmatprep.subr.mxu0 0.0
        %852 = vmatpush1.msra.mxu0 0.0
        %853 = vmatprep.subr.mxu0 0.0
        %854 = vmatpush1.msra.mxu0 0.0
        %855 = vmatprep.subr.mxu0 0.0
        %856 = vmatpush1.msra.mxu0 0.0
        %857 = vmatprep.subr.mxu0 0.0
        %858 = vmatpush1.msra.mxu0 0.0
        %859 = vmatprep.subr.mxu0 0.0
        %860 = vmatpush1.msra.mxu0 0.0
        %861 = vmatprep.subr.mxu0 0.0
        %862 = vmatpush1.msra.mxu0 0.0
        %863 = vmatprep.subr.mxu0 0.0
        %864 = vmatpush1.msra.mxu0 0.0
        %865 = vmatprep.subr.mxu0 0.0
        %866 = vmatpush1.msra.mxu0 0.0
        %867 = vmatprep.subr.mxu0 0.0
        %868 = vmatpush1.msra.mxu0 0.0
        %869 = vmatprep.subr.mxu0 0.0
        %870 = vmatpush1.msra.mxu0 0.0
        %871 = vmatprep.mubr.f32.mxu0 0.0
        %872 = vmatmul.mubr.f32.gmra.mrb[0].mxu0 %v802
        %v873 = vpop.f32.mrb[0].mxu0
        %v874 = vadd.f32 0.0, %v873
        %v875 = vpop.f32.mrb[0].mxu0
        %876 = vdwg.mxu0
        %v877 = vlaneseq
        %v878 = vshrl.u32 %v877, 7
        %v879 = vsub.s32 0, %v878
        %v880 = vrot.slane %v874, %v879
        %v881 = vmul.f32 %v425, %v880
        %v882 = vmul.f32 %v428, %v880
        %v883 = vadd.f32 %v796, %v881
        %v884 = vadd.f32 %v797, %v882
        %s885 = scalar_lea.vmem %s346, 16 [#allocation2]
        %v886 = vld [vmem:[%s885] sm:$0xf]
        %v887 = vld [vmem:[%s885 + $0x4] sm:$0xf]
        %s888 = scalar_lea.vmem %s3, 16
        %v889 = vld [vmem:[%s888] sm:$0xff]
        %v892 = vunpack.c.l.b16 %v886
        %v893 = vunpack.c.l.b16 %v887
        %v894 = vpack.c.b16 %v893, %v892
        %v896 = vsel %vm416, %v894, 0
        %898 = vmatprep.subr.bf16.mxu0 0
        %899 = vmatpush1.bf16.msra.mxu0 %v447
        %900 = vmatprep.subr.bf16.mxu0 0
        %901 = vmatpush1.bf16.msra.mxu0 0
        %902 = vmatprep.subr.bf16.mxu0 0
        %903 = vmatpush1.bf16.msra.mxu0 0
        %904 = vmatprep.subr.bf16.mxu0 0
        %905 = vmatpush1.bf16.msra.mxu0 0
        %906 = vmatprep.subr.bf16.mxu0 0
        %907 = vmatpush1.bf16.msra.mxu0 0
        %908 = vmatprep.subr.bf16.mxu0 0
        %909 = vmatpush1.bf16.msra.mxu0 0
        %910 = vmatprep.subr.bf16.mxu0 0
        %911 = vmatpush1.bf16.msra.mxu0 0
        %912 = vmatprep.subr.bf16.mxu0 0
        %913 = vmatpush1.bf16.msra.mxu0 0
        %914 = vmatprep.subr.bf16.mxu0 0
        %915 = vmatpush1.bf16.msra.mxu0 0
        %916 = vmatprep.subr.bf16.mxu0 0
        %917 = vmatpush1.bf16.msra.mxu0 0
        %918 = vmatprep.subr.bf16.mxu0 0
        %919 = vmatpush1.bf16.msra.mxu0 0
        %920 = vmatprep.subr.bf16.mxu0 0
        %921 = vmatpush1.bf16.msra.mxu0 0
        %922 = vmatprep.subr.bf16.mxu0 0
        %923 = vmatpush1.bf16.msra.mxu0 0
        %924 = vmatprep.subr.bf16.mxu0 0
        %925 = vmatpush1.bf16.msra.mxu0 0
        %926 = vmatprep.subr.bf16.mxu0 0
        %927 = vmatpush1.bf16.msra.mxu0 0
        %928 = vmatprep.subr.bf16.mxu0 0
        %929 = vmatpush1.bf16.msra.mxu0 0
        %930 = vmatprep.mubr.bf16.mxu0 0
        %931 = vmatmul.mubr.bf16.gmra.mrb[0].mxu0 %v896
        %v932 = vpop.f32.mrb[0].mxu0
        %v933 = vadd.f32 0.0, %v932
        %v934 = vpop.f32.mrb[0].mxu0
        %v935 = vpop.f32.mrb[0].mxu0
        %v936 = vadd.f32 0.0, %v935
        %v937 = vpop.f32.mrb[0].mxu0
        %938 = vdwg.mxu0
        %v940 = vsel %vm579, %v933, 0
        %v943 = vsel %vm579, %v936, 0
        %945 = vmatprep.subr.mxu0 0.0
        %946 = vmatpush1.msra.mxu0 %v889
        %947 = vmatprep.subr.mxu0 0.0
        %948 = vmatpush1.msra.mxu0 0.0
        %949 = vmatprep.subr.mxu0 0.0
        %950 = vmatpush1.msra.mxu0 0.0
        %951 = vmatprep.subr.mxu0 0.0
        %952 = vmatpush1.msra.mxu0 0.0
        %953 = vmatprep.subr.mxu0 0.0
        %954 = vmatpush1.msra.mxu0 0.0
        %955 = vmatprep.subr.mxu0 0.0
        %956 = vmatpush1.msra.mxu0 0.0
        %957 = vmatprep.subr.mxu0 0.0
        %958 = vmatpush1.msra.mxu0 0.0
        %959 = vmatprep.subr.mxu0 0.0
        %960 = vmatpush1.msra.mxu0 0.0
        %961 = vmatprep.subr.mxu0 0.0
        %962 = vmatpush1.msra.mxu0 0.0
        %963 = vmatprep.subr.mxu0 0.0
        %964 = vmatpush1.msra.mxu0 0.0
        %965 = vmatprep.subr.mxu0 0.0
        %966 = vmatpush1.msra.mxu0 0.0
        %967 = vmatprep.subr.mxu0 0.0
        %968 = vmatpush1.msra.mxu0 0.0
        %969 = vmatprep.subr.mxu0 0.0
        %970 = vmatpush1.msra.mxu0 0.0
        %971 = vmatprep.subr.mxu0 0.0
        %972 = vmatpush1.msra.mxu0 0.0
        %973 = vmatprep.subr.mxu0 0.0
        %974 = vmatpush1.msra.mxu0 0.0
        %975 = vmatprep.subr.mxu0 0.0
        %976 = vmatpush1.msra.mxu0 0.0
        %977 = vmatprep.subr.mxu0 0.0
        %978 = vmatpush1.msra.mxu0 0.0
        %979 = vmatprep.subr.mxu0 0.0
        %980 = vmatpush1.msra.mxu0 0.0
        %981 = vmatprep.subr.mxu0 0.0
        %982 = vmatpush1.msra.mxu0 0.0
        %983 = vmatprep.subr.mxu0 0.0
        %984 = vmatpush1.msra.mxu0 0.0
        %985 = vmatprep.subr.mxu0 0.0
        %986 = vmatpush1.msra.mxu0 0.0
        %987 = vmatprep.subr.mxu0 0.0
        %988 = vmatpush1.msra.mxu0 0.0
        %989 = vmatprep.subr.mxu0 0.0
        %990 = vmatpush1.msra.mxu0 0.0
        %991 = vmatprep.subr.mxu0 0.0
        %992 = vmatpush1.msra.mxu0 0.0
        %993 = vmatprep.subr.mxu0 0.0
        %994 = vmatpush1.msra.mxu0 0.0
        %995 = vmatprep.subr.mxu0 0.0
        %996 = vmatpush1.msra.mxu0 0.0
        %997 = vmatprep.subr.mxu0 0.0
        %998 = vmatpush1.msra.mxu0 0.0
        %999 = vmatprep.subr.mxu0 0.0
        %1000 = vmatpush1.msra.mxu0 0.0
        %1001 = vmatprep.subr.mxu0 0.0
        %1002 = vmatpush1.msra.mxu0 0.0
        %1003 = vmatprep.subr.mxu0 0.0
        %1004 = vmatpush1.msra.mxu0 0.0
        %1005 = vmatprep.subr.mxu0 0.0
        %1006 = vmatpush1.msra.mxu0 0.0
        %1007 = vmatprep.subr.mxu0 0.0
        %1008 = vmatpush1.msra.mxu0 0.0
        %1009 = vmatprep.mubr.f32.mxu0 0.0
        %1010 = vmatmul.mubr.f32.gmra.mrb[0].mxu0 %v940
        %v1011 = vpop.f32.mrb[0].mxu0
        %v1012 = vadd.f32 0.0, %v1011
        %v1013 = vpop.f32.mrb[0].mxu0
        %1014 = vmatprep.mubr.f32.mxu0 0.0
        %1015 = vmatmul.mubr.f32.gmra.mrb[0].mxu0 %v943
        %v1016 = vpop.f32.mrb[0].mxu0
        %v1017 = vadd.f32 0.0, %v1016
        %v1018 = vpop.f32.mrb[0].mxu0
        %1019 = vdwg.mxu0
        %v1020 = vadd.f32 %v883, %v1012
        %v1021 = vadd.f32 %v884, %v1017
        %v1022 = vld [vmem:[%s402 + $0x2] sm:$0x1]
        %s1023 = scalar_lea.vmem %s4, 8
        %v1024 = vld [vmem:[%s1023] sm:$0xf]
        %v1026 = vsel %vm495, %v1022, 0
        %v1029 = vsel %vm499, %v1024, 0
        %1031 = vmatprep.subr.mxu0 0.0
        %1032 = vmatpush1.msra.mxu0 %v1029
        %1033 = vmatprep.subr.mxu0 0.0
        %1034 = vmatpush1.msra.mxu0 0.0
        %1035 = vmatprep.subr.mxu0 0.0
        %1036 = vmatpush1.msra.mxu0 0.0
        %1037 = vmatprep.subr.mxu0 0.0
        %1038 = vmatpush1.msra.mxu0 0.0
        %1039 = vmatprep.subr.mxu0 0.0
        %1040 = vmatpush1.msra.mxu0 0.0
        %1041 = vmatprep.subr.mxu0 0.0
        %1042 = vmatpush1.msra.mxu0 0.0
        %1043 = vmatprep.subr.mxu0 0.0
        %1044 = vmatpush1.msra.mxu0 0.0
        %1045 = vmatprep.subr.mxu0 0.0
        %1046 = vmatpush1.msra.mxu0 0.0
        %1047 = vmatprep.subr.mxu0 0.0
        %1048 = vmatpush1.msra.mxu0 0.0
        %1049 = vmatprep.subr.mxu0 0.0
        %1050 = vmatpush1.msra.mxu0 0.0
        %1051 = vmatprep.subr.mxu0 0.0
        %1052 = vmatpush1.msra.mxu0 0.0
        %1053 = vmatprep.subr.mxu0 0.0
        %1054 = vmatpush1.msra.mxu0 0.0
        %1055 = vmatprep.subr.mxu0 0.0
        %1056 = vmatpush1.msra.mxu0 0.0
        %1057 = vmatprep.subr.mxu0 0.0
        %1058 = vmatpush1.msra.mxu0 0.0
        %1059 = vmatprep.subr.mxu0 0.0
        %1060 = vmatpush1.msra.mxu0 0.0
        %1061 = vmatprep.subr.mxu0 0.0
        %1062 = vmatpush1.msra.mxu0 0.0
        %1063 = vmatprep.subr.mxu0 0.0
        %1064 = vmatpush1.msra.mxu0 0.0
        %1065 = vmatprep.subr.mxu0 0.0
        %1066 = vmatpush1.msra.mxu0 0.0
        %1067 = vmatprep.subr.mxu0 0.0
        %1068 = vmatpush1.msra.mxu0 0.0
        %1069 = vmatprep.subr.mxu0 0.0
        %1070 = vmatpush1.msra.mxu0 0.0
        %1071 = vmatprep.subr.mxu0 0.0
        %1072 = vmatpush1.msra.mxu0 0.0
        %1073 = vmatprep.subr.mxu0 0.0
        %1074 = vmatpush1.msra.mxu0 0.0
        %1075 = vmatprep.subr.mxu0 0.0
        %1076 = vmatpush1.msra.mxu0 0.0
        %1077 = vmatprep.subr.mxu0 0.0
        %1078 = vmatpush1.msra.mxu0 0.0
        %1079 = vmatprep.subr.mxu0 0.0
        %1080 = vmatpush1.msra.mxu0 0.0
        %1081 = vmatprep.subr.mxu0 0.0
        %1082 = vmatpush1.msra.mxu0 0.0
        %1083 = vmatprep.subr.mxu0 0.0
        %1084 = vmatpush1.msra.mxu0 0.0
        %1085 = vmatprep.subr.mxu0 0.0
        %1086 = vmatpush1.msra.mxu0 0.0
        %1087 = vmatprep.subr.mxu0 0.0
        %1088 = vmatpush1.msra.mxu0 0.0
        %1089 = vmatprep.subr.mxu0 0.0
        %1090 = vmatpush1.msra.mxu0 0.0
        %1091 = vmatprep.subr.mxu0 0.0
        %1092 = vmatpush1.msra.mxu0 0.0
        %1093 = vmatprep.subr.mxu0 0.0
        %1094 = vmatpush1.msra.mxu0 0.0
        %1095 = vmatprep.mubr.f32.mxu0 0.0
        %1096 = vmatmul.mubr.f32.gmra.mrb[0].mxu0 %v1026
        %v1097 = vpop.f32.mrb[0].mxu0
        %v1098 = vadd.f32 0.0, %v1097
        %v1099 = vpop.f32.mrb[0].mxu0
        %1100 = vdwg.mxu0
        %v1101 = vlaneseq
        %v1102 = vshrl.u32 %v1101, 7
        %v1103 = vsub.s32 0, %v1102
        %v1104 = vrot.slane %v1098, %v1103
        %v1105 = vmul.f32 %v431, %v1104
        %v1106 = vmul.f32 %v434, %v1104
        %v1107 = vadd.f32 %v1020, %v1105
        %v1108 = vadd.f32 %v1021, %v1106
        %v1109 = vld [vmem:[%s5] sm:$0x1]
        %v1111 = vlaneseq
        %v1112 = vshrl.u32 %v1111, 7
        %v1113 = vsub.s32 0, %v1112
        %v1114 = vrot.slane %v1109, %v1113
        %v1116 = vadd.f32 %v1107, %v1114
        %v1117 = vadd.f32 %v1108, %v1114
        %v1118 = vmax.f32 %v1116, 0.0
        %v1119 = vmax.f32 %v1117, 0.0
        %v1120 = vpack.c.bf16 %v1119, %v1118
        %v1121 = vld [vmem:[#allocation5] sm:$0xff]
        %v1122 = vld [vmem:[#allocation5 + $0x8] sm:$0xff]
        %v1123 = vld [vmem:[#allocation5 + $0x10] sm:$0xff]
        %v1124 = vld [vmem:[#allocation5 + $0x18] sm:$0xff]
        %1125 = vmatprep.subr.bf16.mxu0 0
        %1126 = vmatpush1.bf16.msra.mxu0 %v1120
        %1127 = vmatprep.subr.bf16.mxu0 0
        %1128 = vmatpush1.bf16.msra.mxu0 0
        %1129 = vmatprep.subr.bf16.mxu0 0
        %1130 = vmatpush1.bf16.msra.mxu0 0
        %1131 = vmatprep.subr.bf16.mxu0 0
        %1132 = vmatpush1.bf16.msra.mxu0 0
        %1133 = vmatprep.subr.bf16.mxu0 0
        %1134 = vmatpush1.bf16.msra.mxu0 0
        %1135 = vmatprep.subr.bf16.mxu0 0
        %1136 = vmatpush1.bf16.msra.mxu0 0
        %1137 = vmatprep.subr.bf16.mxu0 0
        %1138 = vmatpush1.bf16.msra.mxu0 0
        %1139 = vmatprep.subr.bf16.mxu0 0
        %1140 = vmatpush1.bf16.msra.mxu0 0
        %1141 = vmatprep.subr.bf16.mxu0 0
        %1142 = vmatpush1.bf16.msra.mxu0 0
        %1143 = vmatprep.subr.bf16.mxu0 0
        %1144 = vmatpush1.bf16.msra.mxu0 0
        %1145 = vmatprep.subr.bf16.mxu0 0
        %1146 = vmatpush1.bf16.msra.mxu0 0
        %1147 = vmatprep.subr.bf16.mxu0 0
        %1148 = vmatpush1.bf16.msra.mxu0 0
        %1149 = vmatprep.subr.bf16.mxu0 0
        %1150 = vmatpush1.bf16.msra.mxu0 0
        %1151 = vmatprep.subr.bf16.mxu0 0
        %1152 = vmatpush1.bf16.msra.mxu0 0
        %1153 = vmatprep.subr.bf16.mxu0 0
        %1154 = vmatpush1.bf16.msra.mxu0 0
        %1155 = vmatprep.subr.bf16.mxu0 0
        %1156 = vmatpush1.bf16.msra.mxu0 0
        %1157 = vmatprep.mubr.bf16.mxu0 0
        %1158 = vmatmul.mubr.bf16.gmra.mrb[0].mxu0 %v450
        %v1159 = vpop.f32.mrb[0].mxu0
        %v1160 = vadd.f32 0.0, %v1159
        %v1161 = vpop.f32.mrb[0].mxu0
        %v1162 = vpop.f32.mrb[0].mxu0
        %v1163 = vadd.f32 0.0, %v1162
        %v1164 = vpop.f32.mrb[0].mxu0
        %1165 = vdwg.mxu0
        %v1166 = vld [vmem:[%s7] sm:$0xf]
        %v1168 = vsel %vm499, %v1166, 0
        %1170 = vmatprep.subr.mxu0 0.0
        %1171 = vmatpush1.msra.mxu0 %v1168
        %1172 = vmatprep.subr.mxu0 0.0
        %1173 = vmatpush1.msra.mxu0 0.0
        %1174 = vmatprep.subr.mxu0 0.0
        %1175 = vmatpush1.msra.mxu0 0.0
        %1176 = vmatprep.subr.mxu0 0.0
        %1177 = vmatpush1.msra.mxu0 0.0
        %1178 = vmatprep.subr.mxu0 0.0
        %1179 = vmatpush1.msra.mxu0 0.0
        %1180 = vmatprep.subr.mxu0 0.0
        %1181 = vmatpush1.msra.mxu0 0.0
        %1182 = vmatprep.subr.mxu0 0.0
        %1183 = vmatpush1.msra.mxu0 0.0
        %1184 = vmatprep.subr.mxu0 0.0
        %1185 = vmatpush1.msra.mxu0 0.0
        %1186 = vmatprep.subr.mxu0 0.0
        %1187 = vmatpush1.msra.mxu0 0.0
        %1188 = vmatprep.subr.mxu0 0.0
        %1189 = vmatpush1.msra.mxu0 0.0
        %1190 = vmatprep.subr.mxu0 0.0
        %1191 = vmatpush1.msra.mxu0 0.0
        %1192 = vmatprep.subr.mxu0 0.0
        %1193 = vmatpush1.msra.mxu0 0.0
        %1194 = vmatprep.subr.mxu0 0.0
        %1195 = vmatpush1.msra.mxu0 0.0
        %1196 = vmatprep.subr.mxu0 0.0
        %1197 = vmatpush1.msra.mxu0 0.0
        %1198 = vmatprep.subr.mxu0 0.0
        %1199 = vmatpush1.msra.mxu0 0.0
        %1200 = vmatprep.subr.mxu0 0.0
        %1201 = vmatpush1.msra.mxu0 0.0
        %1202 = vmatprep.subr.mxu0 0.0
        %1203 = vmatpush1.msra.mxu0 0.0
        %1204 = vmatprep.subr.mxu0 0.0
        %1205 = vmatpush1.msra.mxu0 0.0
        %1206 = vmatprep.subr.mxu0 0.0
        %1207 = vmatpush1.msra.mxu0 0.0
        %1208 = vmatprep.subr.mxu0 0.0
        %1209 = vmatpush1.msra.mxu0 0.0
        %1210 = vmatprep.subr.mxu0 0.0
        %1211 = vmatpush1.msra.mxu0 0.0
        %1212 = vmatprep.subr.mxu0 0.0
        %1213 = vmatpush1.msra.mxu0 0.0
        %1214 = vmatprep.subr.mxu0 0.0
        %1215 = vmatpush1.msra.mxu0 0.0
        %1216 = vmatprep.subr.mxu0 0.0
        %1217 = vmatpush1.msra.mxu0 0.0
        %1218 = vmatprep.subr.mxu0 0.0
        %1219 = vmatpush1.msra.mxu0 0.0
        %1220 = vmatprep.subr.mxu0 0.0
        %1221 = vmatpush1.msra.mxu0 0.0
        %1222 = vmatprep.subr.mxu0 0.0
        %1223 = vmatpush1.msra.mxu0 0.0
        %1224 = vmatprep.subr.mxu0 0.0
        %1225 = vmatpush1.msra.mxu0 0.0
        %1226 = vmatprep.subr.mxu0 0.0
        %1227 = vmatpush1.msra.mxu0 0.0
        %1228 = vmatprep.subr.mxu0 0.0
        %1229 = vmatpush1.msra.mxu0 0.0
        %1230 = vmatprep.subr.mxu0 0.0
        %1231 = vmatpush1.msra.mxu0 0.0
        %1232 = vmatprep.subr.mxu0 0.0
        %1233 = vmatpush1.msra.mxu0 0.0
        %1234 = vmatprep.mubr.f32.mxu0 0.0
        %1235 = vmatmul.mubr.f32.gmra.mrb[0].mxu0 %v497
        %v1236 = vpop.f32.mrb[0].mxu0
        %v1237 = vadd.f32 0.0, %v1236
        %v1238 = vpop.f32.mrb[0].mxu0
        %1239 = vdwg.mxu0
        %v1240 = vlaneseq
        %v1241 = vshrl.u32 %v1240, 7
        %v1242 = vsub.s32 0, %v1241
        %v1243 = vrot.slane %v1237, %v1242
        %v1244 = vmul.f32 %v419, %v1243
        %v1245 = vmul.f32 %v422, %v1243
        %vm1246 = vcmask 261120
        %v1248 = vsel %vm1246, %v1160, 0
        %v1251 = vsel %vm1246, %v1163, 0
        %1253 = vmatprep.subr.mxu0 0.0
        %1254 = vmatpush1.msra.mxu0 %v1121
        %1255 = vmatprep.subr.mxu0 0.0
        %1256 = vmatpush1.msra.mxu0 %v1122
        %1257 = vmatprep.subr.mxu0 0.0
        %1258 = vmatpush1.msra.mxu0 %v1123
        %1259 = vmatprep.subr.mxu0 0.0
        %1260 = vmatpush1.msra.mxu0 %v1124
        %1261 = vmatprep.subr.mxu0 0.0
        %1262 = vmatpush1.msra.mxu0 0.0
        %1263 = vmatprep.subr.mxu0 0.0
        %1264 = vmatpush1.msra.mxu0 0.0
        %1265 = vmatprep.subr.mxu0 0.0
        %1266 = vmatpush1.msra.mxu0 0.0
        %1267 = vmatprep.subr.mxu0 0.0
        %1268 = vmatpush1.msra.mxu0 0.0
        %1269 = vmatprep.subr.mxu0 0.0
        %1270 = vmatpush1.msra.mxu0 0.0
        %1271 = vmatprep.subr.mxu0 0.0
        %1272 = vmatpush1.msra.mxu0 0.0
        %1273 = vmatprep.subr.mxu0 0.0
        %1274 = vmatpush1.msra.mxu0 0.0
        %1275 = vmatprep.subr.mxu0 0.0
        %1276 = vmatpush1.msra.mxu0 0.0
        %1277 = vmatprep.subr.mxu0 0.0
        %1278 = vmatpush1.msra.mxu0 0.0
        %1279 = vmatprep.subr.mxu0 0.0
        %1280 = vmatpush1.msra.mxu0 0.0
        %1281 = vmatprep.subr.mxu0 0.0
        %1282 = vmatpush1.msra.mxu0 0.0
        %1283 = vmatprep.subr.mxu0 0.0
        %1284 = vmatpush1.msra.mxu0 0.0
        %1285 = vmatprep.subr.mxu0 0.0
        %1286 = vmatpush1.msra.mxu0 0.0
        %1287 = vmatprep.subr.mxu0 0.0
        %1288 = vmatpush1.msra.mxu0 0.0
        %1289 = vmatprep.subr.mxu0 0.0
        %1290 = vmatpush1.msra.mxu0 0.0
        %1291 = vmatprep.subr.mxu0 0.0
        %1292 = vmatpush1.msra.mxu0 0.0
        %1293 = vmatprep.subr.mxu0 0.0
        %1294 = vmatpush1.msra.mxu0 0.0
        %1295 = vmatprep.subr.mxu0 0.0
        %1296 = vmatpush1.msra.mxu0 0.0
        %1297 = vmatprep.subr.mxu0 0.0
        %1298 = vmatpush1.msra.mxu0 0.0
        %1299 = vmatprep.subr.mxu0 0.0
        %1300 = vmatpush1.msra.mxu0 0.0
        %1301 = vmatprep.subr.mxu0 0.0
        %1302 = vmatpush1.msra.mxu0 0.0
        %1303 = vmatprep.subr.mxu0 0.0
        %1304 = vmatpush1.msra.mxu0 0.0
        %1305 = vmatprep.subr.mxu0 0.0
        %1306 = vmatpush1.msra.mxu0 0.0
        %1307 = vmatprep.subr.mxu0 0.0
        %1308 = vmatpush1.msra.mxu0 0.0
        %1309 = vmatprep.subr.mxu0 0.0
        %1310 = vmatpush1.msra.mxu0 0.0
        %1311 = vmatprep.subr.mxu0 0.0
        %1312 = vmatpush1.msra.mxu0 0.0
        %1313 = vmatprep.subr.mxu0 0.0
        %1314 = vmatpush1.msra.mxu0 0.0
        %1315 = vmatprep.subr.mxu0 0.0
        %1316 = vmatpush1.msra.mxu0 0.0
        %1317 = vmatprep.mubr.f32.mxu0 0.0
        %1318 = vmatmul.mubr.f32.gmra.mrb[0].mxu0 %v1248
        %v1319 = vpop.f32.mrb[0].mxu0
        %v1320 = vadd.f32 %v1244, %v1319
        %v1321 = vpop.f32.mrb[0].mxu0
        %1322 = vmatprep.mubr.f32.mxu0 0.0
        %1323 = vmatmul.mubr.f32.gmra.mrb[0].mxu0 %v1251
        %v1324 = vpop.f32.mrb[0].mxu0
        %v1325 = vadd.f32 %v1245, %v1324
        %v1326 = vpop.f32.mrb[0].mxu0
        %1327 = vdwg.mxu0
        %s1328 = scalar_lea.vmem [#allocation5], 32
        %v1329 = vld [vmem:[%s1328] sm:$0xff]
        %v1330 = vld [vmem:[%s1328 + $0x8] sm:$0xff]
        %v1331 = vld [vmem:[%s1328 + $0x10] sm:$0xff]
        %v1332 = vld [vmem:[%s1328 + $0x18] sm:$0xff]
        %1333 = vmatprep.subr.bf16.mxu0 0
        %1334 = vmatpush1.bf16.msra.mxu0 %v1120
        %1335 = vmatprep.subr.bf16.mxu0 0
        %1336 = vmatpush1.bf16.msra.mxu0 0
        %1337 = vmatprep.subr.bf16.mxu0 0
        %1338 = vmatpush1.bf16.msra.mxu0 0
        %1339 = vmatprep.subr.bf16.mxu0 0
        %1340 = vmatpush1.bf16.msra.mxu0 0
        %1341 = vmatprep.subr.bf16.mxu0 0
        %1342 = vmatpush1.bf16.msra.mxu0 0
        %1343 = vmatprep.subr.bf16.mxu0 0
        %1344 = vmatpush1.bf16.msra.mxu0 0
        %1345 = vmatprep.subr.bf16.mxu0 0
        %1346 = vmatpush1.bf16.msra.mxu0 0
        %1347 = vmatprep.subr.bf16.mxu0 0
        %1348 = vmatpush1.bf16.msra.mxu0 0
        %1349 = vmatprep.subr.bf16.mxu0 0
        %1350 = vmatpush1.bf16.msra.mxu0 0
        %1351 = vmatprep.subr.bf16.mxu0 0
        %1352 = vmatpush1.bf16.msra.mxu0 0
        %1353 = vmatprep.subr.bf16.mxu0 0
        %1354 = vmatpush1.bf16.msra.mxu0 0
        %1355 = vmatprep.subr.bf16.mxu0 0
        %1356 = vmatpush1.bf16.msra.mxu0 0
        %1357 = vmatprep.subr.bf16.mxu0 0
        %1358 = vmatpush1.bf16.msra.mxu0 0
        %1359 = vmatprep.subr.bf16.mxu0 0
        %1360 = vmatpush1.bf16.msra.mxu0 0
        %1361 = vmatprep.subr.bf16.mxu0 0
        %1362 = vmatpush1.bf16.msra.mxu0 0
        %1363 = vmatprep.subr.bf16.mxu0 0
        %1364 = vmatpush1.bf16.msra.mxu0 0
        %1365 = vmatprep.mubr.bf16.mxu0 0
        %1366 = vmatmul.mubr.bf16.gmra.mrb[0].mxu0 %v672
        %v1367 = vpop.f32.mrb[0].mxu0
        %v1368 = vadd.f32 0.0, %v1367
        %v1369 = vpop.f32.mrb[0].mxu0
        %v1370 = vpop.f32.mrb[0].mxu0
        %v1371 = vadd.f32 0.0, %v1370
        %v1372 = vpop.f32.mrb[0].mxu0
        %1373 = vdwg.mxu0
        %v1375 = vsel %vm1246, %v1368, 0
        %v1378 = vsel %vm1246, %v1371, 0
        %1380 = vmatprep.subr.mxu0 0.0
        %1381 = vmatpush1.msra.mxu0 %v1329
        %1382 = vmatprep.subr.mxu0 0.0
        %1383 = vmatpush1.msra.mxu0 %v1330
        %1384 = vmatprep.subr.mxu0 0.0
        %1385 = vmatpush1.msra.mxu0 %v1331
        %1386 = vmatprep.subr.mxu0 0.0
        %1387 = vmatpush1.msra.mxu0 %v1332
        %1388 = vmatprep.subr.mxu0 0.0
        %1389 = vmatpush1.msra.mxu0 0.0
        %1390 = vmatprep.subr.mxu0 0.0
        %1391 = vmatpush1.msra.mxu0 0.0
        %1392 = vmatprep.subr.mxu0 0.0
        %1393 = vmatpush1.msra.mxu0 0.0
        %1394 = vmatprep.subr.mxu0 0.0
        %1395 = vmatpush1.msra.mxu0 0.0
        %1396 = vmatprep.subr.mxu0 0.0
        %1397 = vmatpush1.msra.mxu0 0.0
        %1398 = vmatprep.subr.mxu0 0.0
        %1399 = vmatpush1.msra.mxu0 0.0
        %1400 = vmatprep.subr.mxu0 0.0
        %1401 = vmatpush1.msra.mxu0 0.0
        %1402 = vmatprep.subr.mxu0 0.0
        %1403 = vmatpush1.msra.mxu0 0.0
        %1404 = vmatprep.subr.mxu0 0.0
        %1405 = vmatpush1.msra.mxu0 0.0
        %1406 = vmatprep.subr.mxu0 0.0
        %1407 = vmatpush1.msra.mxu0 0.0
        %1408 = vmatprep.subr.mxu0 0.0
        %1409 = vmatpush1.msra.mxu0 0.0
        %1410 = vmatprep.subr.mxu0 0.0
        %1411 = vmatpush1.msra.mxu0 0.0
        %1412 = vmatprep.subr.mxu0 0.0
        %1413 = vmatpush1.msra.mxu0 0.0
        %1414 = vmatprep.subr.mxu0 0.0
        %1415 = vmatpush1.msra.mxu0 0.0
        %1416 = vmatprep.subr.mxu0 0.0
        %1417 = vmatpush1.msra.mxu0 0.0
        %1418 = vmatprep.subr.mxu0 0.0
        %1419 = vmatpush1.msra.mxu0 0.0
        %1420 = vmatprep.subr.mxu0 0.0
        %1421 = vmatpush1.msra.mxu0 0.0
        %1422 = vmatprep.subr.mxu0 0.0
        %1423 = vmatpush1.msra.mxu0 0.0
        %1424 = vmatprep.subr.mxu0 0.0
        %1425 = vmatpush1.msra.mxu0 0.0
        %1426 = vmatprep.subr.mxu0 0.0
        %1427 = vmatpush1.msra.mxu0 0.0
        %1428 = vmatprep.subr.mxu0 0.0
        %1429 = vmatpush1.msra.mxu0 0.0
        %1430 = vmatprep.subr.mxu0 0.0
        %1431 = vmatpush1.msra.mxu0 0.0
        %1432 = vmatprep.subr.mxu0 0.0
        %1433 = vmatpush1.msra.mxu0 0.0
        %1434 = vmatprep.subr.mxu0 0.0
        %1435 = vmatpush1.msra.mxu0 0.0
        %1436 = vmatprep.subr.mxu0 0.0
        %1437 = vmatpush1.msra.mxu0 0.0
        %1438 = vmatprep.subr.mxu0 0.0
        %1439 = vmatpush1.msra.mxu0 0.0
        %1440 = vmatprep.subr.mxu0 0.0
        %1441 = vmatpush1.msra.mxu0 0.0
        %1442 = vmatprep.subr.mxu0 0.0
        %1443 = vmatpush1.msra.mxu0 0.0
        %1444 = vmatprep.mubr.f32.mxu0 0.0
        %1445 = vmatmul.mubr.f32.gmra.mrb[0].mxu0 %v1375
        %v1446 = vpop.f32.mrb[0].mxu0
        %v1447 = vadd.f32 0.0, %v1446
        %v1448 = vpop.f32.mrb[0].mxu0
        %1449 = vmatprep.mubr.f32.mxu0 0.0
        %1450 = vmatmul.mubr.f32.gmra.mrb[0].mxu0 %v1378
        %v1451 = vpop.f32.mrb[0].mxu0
        %v1452 = vadd.f32 0.0, %v1451
        %v1453 = vpop.f32.mrb[0].mxu0
        %1454 = vdwg.mxu0
        %v1455 = vadd.f32 %v1320, %v1447
        %v1456 = vadd.f32 %v1325, %v1452
        %s1457 = scalar_lea.vmem %s7, 4
        %v1458 = vld [vmem:[%s1457] sm:$0xf]
        %v1460 = vsel %vm499, %v1458, 0
        %1462 = vmatprep.subr.mxu0 0.0
        %1463 = vmatpush1.msra.mxu0 %v1460
        %1464 = vmatprep.subr.mxu0 0.0
        %1465 = vmatpush1.msra.mxu0 0.0
        %1466 = vmatprep.subr.mxu0 0.0
        %1467 = vmatpush1.msra.mxu0 0.0
        %1468 = vmatprep.subr.mxu0 0.0
        %1469 = vmatpush1.msra.mxu0 0.0
        %1470 = vmatprep.subr.mxu0 0.0
        %1471 = vmatpush1.msra.mxu0 0.0
        %1472 = vmatprep.subr.mxu0 0.0
        %1473 = vmatpush1.msra.mxu0 0.0
        %1474 = vmatprep.subr.mxu0 0.0
        %1475 = vmatpush1.msra.mxu0 0.0
        %1476 = vmatprep.subr.mxu0 0.0
        %1477 = vmatpush1.msra.mxu0 0.0
        %1478 = vmatprep.subr.mxu0 0.0
        %1479 = vmatpush1.msra.mxu0 0.0
        %1480 = vmatprep.subr.mxu0 0.0
        %1481 = vmatpush1.msra.mxu0 0.0
        %1482 = vmatprep.subr.mxu0 0.0
        %1483 = vmatpush1.msra.mxu0 0.0
        %1484 = vmatprep.subr.mxu0 0.0
        %1485 = vmatpush1.msra.mxu0 0.0
        %1486 = vmatprep.subr.mxu0 0.0
        %1487 = vmatpush1.msra.mxu0 0.0
        %1488 = vmatprep.subr.mxu0 0.0
        %1489 = vmatpush1.msra.mxu0 0.0
        %1490 = vmatprep.subr.mxu0 0.0
        %1491 = vmatpush1.msra.mxu0 0.0
        %1492 = vmatprep.subr.mxu0 0.0
        %1493 = vmatpush1.msra.mxu0 0.0
        %1494 = vmatprep.subr.mxu0 0.0
        %1495 = vmatpush1.msra.mxu0 0.0
        %1496 = vmatprep.subr.mxu0 0.0
        %1497 = vmatpush1.msra.mxu0 0.0
        %1498 = vmatprep.subr.mxu0 0.0
        %1499 = vmatpush1.msra.mxu0 0.0
        %1500 = vmatprep.subr.mxu0 0.0
        %1501 = vmatpush1.msra.mxu0 0.0
        %1502 = vmatprep.subr.mxu0 0.0
        %1503 = vmatpush1.msra.mxu0 0.0
        %1504 = vmatprep.subr.mxu0 0.0
        %1505 = vmatpush1.msra.mxu0 0.0
        %1506 = vmatprep.subr.mxu0 0.0
        %1507 = vmatpush1.msra.mxu0 0.0
        %1508 = vmatprep.subr.mxu0 0.0
        %1509 = vmatpush1.msra.mxu0 0.0
        %1510 = vmatprep.subr.mxu0 0.0
        %1511 = vmatpush1.msra.mxu0 0.0
        %1512 = vmatprep.subr.mxu0 0.0
        %1513 = vmatpush1.msra.mxu0 0.0
        %1514 = vmatprep.subr.mxu0 0.0
        %1515 = vmatpush1.msra.mxu0 0.0
        %1516 = vmatprep.subr.mxu0 0.0
        %1517 = vmatpush1.msra.mxu0 0.0
        %1518 = vmatprep.subr.mxu0 0.0
        %1519 = vmatpush1.msra.mxu0 0.0
        %1520 = vmatprep.subr.mxu0 0.0
        %1521 = vmatpush1.msra.mxu0 0.0
        %1522 = vmatprep.subr.mxu0 0.0
        %1523 = vmatpush1.msra.mxu0 0.0
        %1524 = vmatprep.subr.mxu0 0.0
        %1525 = vmatpush1.msra.mxu0 0.0
        %1526 = vmatprep.mubr.f32.mxu0 0.0
        %1527 = vmatmul.mubr.f32.gmra.mrb[0].mxu0 %v802
        %v1528 = vpop.f32.mrb[0].mxu0
        %v1529 = vadd.f32 0.0, %v1528
        %v1530 = vpop.f32.mrb[0].mxu0
        %1531 = vdwg.mxu0
        %v1532 = vlaneseq
        %v1533 = vshrl.u32 %v1532, 7
        %v1534 = vsub.s32 0, %v1533
        %v1535 = vrot.slane %v1529, %v1534
        %v1536 = vmul.f32 %v425, %v1535
        %v1537 = vmul.f32 %v428, %v1535
        %v1538 = vadd.f32 %v1455, %v1536
        %v1539 = vadd.f32 %v1456, %v1537
        %s1540 = scalar_lea.vmem [#allocation5], 64
        %v1541 = vld [vmem:[%s1540] sm:$0xff]
        %v1542 = vld [vmem:[%s1540 + $0x8] sm:$0xff]
        %v1543 = vld [vmem:[%s1540 + $0x10] sm:$0xff]
        %v1544 = vld [vmem:[%s1540 + $0x18] sm:$0xff]
        %1545 = vmatprep.subr.bf16.mxu0 0
        %1546 = vmatpush1.bf16.msra.mxu0 %v1120
        %1547 = vmatprep.subr.bf16.mxu0 0
        %1548 = vmatpush1.bf16.msra.mxu0 0
        %1549 = vmatprep.subr.bf16.mxu0 0
        %1550 = vmatpush1.bf16.msra.mxu0 0
        %1551 = vmatprep.subr.bf16.mxu0 0
        %1552 = vmatpush1.bf16.msra.mxu0 0
        %1553 = vmatprep.subr.bf16.mxu0 0
        %1554 = vmatpush1.bf16.msra.mxu0 0
        %1555 = vmatprep.subr.bf16.mxu0 0
        %1556 = vmatpush1.bf16.msra.mxu0 0
        %1557 = vmatprep.subr.bf16.mxu0 0
        %1558 = vmatpush1.bf16.msra.mxu0 0
        %1559 = vmatprep.subr.bf16.mxu0 0
        %1560 = vmatpush1.bf16.msra.mxu0 0
        %1561 = vmatprep.subr.bf16.mxu0 0
        %1562 = vmatpush1.bf16.msra.mxu0 0
        %1563 = vmatprep.subr.bf16.mxu0 0
        %1564 = vmatpush1.bf16.msra.mxu0 0
        %1565 = vmatprep.subr.bf16.mxu0 0
        %1566 = vmatpush1.bf16.msra.mxu0 0
        %1567 = vmatprep.subr.bf16.mxu0 0
        %1568 = vmatpush1.bf16.msra.mxu0 0
        %1569 = vmatprep.subr.bf16.mxu0 0
        %1570 = vmatpush1.bf16.msra.mxu0 0
        %1571 = vmatprep.subr.bf16.mxu0 0
        %1572 = vmatpush1.bf16.msra.mxu0 0
        %1573 = vmatprep.subr.bf16.mxu0 0
        %1574 = vmatpush1.bf16.msra.mxu0 0
        %1575 = vmatprep.subr.bf16.mxu0 0
        %1576 = vmatpush1.bf16.msra.mxu0 0
        %1577 = vmatprep.mubr.bf16.mxu0 0
        %1578 = vmatmul.mubr.bf16.gmra.mrb[0].mxu0 %v896
        %v1579 = vpop.f32.mrb[0].mxu0
        %v1580 = vadd.f32 0.0, %v1579
        %v1581 = vpop.f32.mrb[0].mxu0
        %v1582 = vpop.f32.mrb[0].mxu0
        %v1583 = vadd.f32 0.0, %v1582
        %v1584 = vpop.f32.mrb[0].mxu0
        %1585 = vdwg.mxu0
        %v1587 = vsel %vm1246, %v1580, 0
        %v1590 = vsel %vm1246, %v1583, 0
        %1592 = vmatprep.subr.mxu0 0.0
        %1593 = vmatpush1.msra.mxu0 %v1541
        %1594 = vmatprep.subr.mxu0 0.0
        %1595 = vmatpush1.msra.mxu0 %v1542
        %1596 = vmatprep.subr.mxu0 0.0
        %1597 = vmatpush1.msra.mxu0 %v1543
        %1598 = vmatprep.subr.mxu0 0.0
        %1599 = vmatpush1.msra.mxu0 %v1544
        %1600 = vmatprep.subr.mxu0 0.0
        %1601 = vmatpush1.msra.mxu0 0.0
        %1602 = vmatprep.subr.mxu0 0.0
        %1603 = vmatpush1.msra.mxu0 0.0
        %1604 = vmatprep.subr.mxu0 0.0
        %1605 = vmatpush1.msra.mxu0 0.0
        %1606 = vmatprep.subr.mxu0 0.0
        %1607 = vmatpush1.msra.mxu0 0.0
        %1608 = vmatprep.subr.mxu0 0.0
        %1609 = vmatpush1.msra.mxu0 0.0
        %1610 = vmatprep.subr.mxu0 0.0
        %1611 = vmatpush1.msra.mxu0 0.0
        %1612 = vmatprep.subr.mxu0 0.0
        %1613 = vmatpush1.msra.mxu0 0.0
        %1614 = vmatprep.subr.mxu0 0.0
        %1615 = vmatpush1.msra.mxu0 0.0
        %1616 = vmatprep.subr.mxu0 0.0
        %1617 = vmatpush1.msra.mxu0 0.0
        %1618 = vmatprep.subr.mxu0 0.0
        %1619 = vmatpush1.msra.mxu0 0.0
        %1620 = vmatprep.subr.mxu0 0.0
        %1621 = vmatpush1.msra.mxu0 0.0
        %1622 = vmatprep.subr.mxu0 0.0
        %1623 = vmatpush1.msra.mxu0 0.0
        %1624 = vmatprep.subr.mxu0 0.0
        %1625 = vmatpush1.msra.mxu0 0.0
        %1626 = vmatprep.subr.mxu0 0.0
        %1627 = vmatpush1.msra.mxu0 0.0
        %1628 = vmatprep.subr.mxu0 0.0
        %1629 = vmatpush1.msra.mxu0 0.0
        %1630 = vmatprep.subr.mxu0 0.0
        %1631 = vmatpush1.msra.mxu0 0.0
        %1632 = vmatprep.subr.mxu0 0.0
        %1633 = vmatpush1.msra.mxu0 0.0
        %1634 = vmatprep.subr.mxu0 0.0
        %1635 = vmatpush1.msra.mxu0 0.0
        %1636 = vmatprep.subr.mxu0 0.0
        %1637 = vmatpush1.msra.mxu0 0.0
        %1638 = vmatprep.subr.mxu0 0.0
        %1639 = vmatpush1.msra.mxu0 0.0
        %1640 = vmatprep.subr.mxu0 0.0
        %1641 = vmatpush1.msra.mxu0 0.0
        %1642 = vmatprep.subr.mxu0 0.0
        %1643 = vmatpush1.msra.mxu0 0.0
        %1644 = vmatprep.subr.mxu0 0.0
        %1645 = vmatpush1.msra.mxu0 0.0
        %1646 = vmatprep.subr.mxu0 0.0
        %1647 = vmatpush1.msra.mxu0 0.0
        %1648 = vmatprep.subr.mxu0 0.0
        %1649 = vmatpush1.msra.mxu0 0.0
        %1650 = vmatprep.subr.mxu0 0.0
        %1651 = vmatpush1.msra.mxu0 0.0
        %1652 = vmatprep.subr.mxu0 0.0
        %1653 = vmatpush1.msra.mxu0 0.0
        %1654 = vmatprep.subr.mxu0 0.0
        %1655 = vmatpush1.msra.mxu0 0.0
        %1656 = vmatprep.mubr.f32.mxu0 0.0
        %1657 = vmatmul.mubr.f32.gmra.mrb[0].mxu0 %v1587
        %v1658 = vpop.f32.mrb[0].mxu0
        %v1659 = vadd.f32 0.0, %v1658
        %v1660 = vpop.f32.mrb[0].mxu0
        %1661 = vmatprep.mubr.f32.mxu0 0.0
        %1662 = vmatmul.mubr.f32.gmra.mrb[0].mxu0 %v1590
        %v1663 = vpop.f32.mrb[0].mxu0
        %v1664 = vadd.f32 0.0, %v1663
        %v1665 = vpop.f32.mrb[0].mxu0
        %1666 = vdwg.mxu0
        %v1667 = vadd.f32 %v1538, %v1659
        %v1668 = vadd.f32 %v1539, %v1664
        %s1669 = scalar_lea.vmem %s7, 8
        %v1670 = vld [vmem:[%s1669] sm:$0xf]
        %v1672 = vsel %vm499, %v1670, 0
        %1674 = vmatprep.subr.mxu0 0.0
        %1675 = vmatpush1.msra.mxu0 %v1672
        %1676 = vmatprep.subr.mxu0 0.0
        %1677 = vmatpush1.msra.mxu0 0.0
        %1678 = vmatprep.subr.mxu0 0.0
        %1679 = vmatpush1.msra.mxu0 0.0
        %1680 = vmatprep.subr.mxu0 0.0
        %1681 = vmatpush1.msra.mxu0 0.0
        %1682 = vmatprep.subr.mxu0 0.0
        %1683 = vmatpush1.msra.mxu0 0.0
        %1684 = vmatprep.subr.mxu0 0.0
        %1685 = vmatpush1.msra.mxu0 0.0
        %1686 = vmatprep.subr.mxu0 0.0
        %1687 = vmatpush1.msra.mxu0 0.0
        %1688 = vmatprep.subr.mxu0 0.0
        %1689 = vmatpush1.msra.mxu0 0.0
        %1690 = vmatprep.subr.mxu0 0.0
        %1691 = vmatpush1.msra.mxu0 0.0
        %1692 = vmatprep.subr.mxu0 0.0
        %1693 = vmatpush1.msra.mxu0 0.0
        %1694 = vmatprep.subr.mxu0 0.0
        %1695 = vmatpush1.msra.mxu0 0.0
        %1696 = vmatprep.subr.mxu0 0.0
        %1697 = vmatpush1.msra.mxu0 0.0
        %1698 = vmatprep.subr.mxu0 0.0
        %1699 = vmatpush1.msra.mxu0 0.0
        %1700 = vmatprep.subr.mxu0 0.0
        %1701 = vmatpush1.msra.mxu0 0.0
        %1702 = vmatprep.subr.mxu0 0.0
        %1703 = vmatpush1.msra.mxu0 0.0
        %1704 = vmatprep.subr.mxu0 0.0
        %1705 = vmatpush1.msra.mxu0 0.0
        %1706 = vmatprep.subr.mxu0 0.0
        %1707 = vmatpush1.msra.mxu0 0.0
        %1708 = vmatprep.subr.mxu0 0.0
        %1709 = vmatpush1.msra.mxu0 0.0
        %1710 = vmatprep.subr.mxu0 0.0
        %1711 = vmatpush1.msra.mxu0 0.0
        %1712 = vmatprep.subr.mxu0 0.0
        %1713 = vmatpush1.msra.mxu0 0.0
        %1714 = vmatprep.subr.mxu0 0.0
        %1715 = vmatpush1.msra.mxu0 0.0
        %1716 = vmatprep.subr.mxu0 0.0
        %1717 = vmatpush1.msra.mxu0 0.0
        %1718 = vmatprep.subr.mxu0 0.0
        %1719 = vmatpush1.msra.mxu0 0.0
        %1720 = vmatprep.subr.mxu0 0.0
        %1721 = vmatpush1.msra.mxu0 0.0
        %1722 = vmatprep.subr.mxu0 0.0
        %1723 = vmatpush1.msra.mxu0 0.0
        %1724 = vmatprep.subr.mxu0 0.0
        %1725 = vmatpush1.msra.mxu0 0.0
        %1726 = vmatprep.subr.mxu0 0.0
        %1727 = vmatpush1.msra.mxu0 0.0
        %1728 = vmatprep.subr.mxu0 0.0
        %1729 = vmatpush1.msra.mxu0 0.0
        %1730 = vmatprep.subr.mxu0 0.0
        %1731 = vmatpush1.msra.mxu0 0.0
        %1732 = vmatprep.subr.mxu0 0.0
        %1733 = vmatpush1.msra.mxu0 0.0
        %1734 = vmatprep.subr.mxu0 0.0
        %1735 = vmatpush1.msra.mxu0 0.0
        %1736 = vmatprep.subr.mxu0 0.0
        %1737 = vmatpush1.msra.mxu0 0.0
        %1738 = vmatprep.mubr.f32.mxu0 0.0
        %1739 = vmatmul.mubr.f32.gmra.mrb[0].mxu0 %v1026
        %v1740 = vpop.f32.mrb[0].mxu0
        %v1741 = vadd.f32 0.0, %v1740
        %v1742 = vpop.f32.mrb[0].mxu0
        %1743 = vdwg.mxu0
        %v1744 = vlaneseq
        %v1745 = vshrl.u32 %v1744, 7
        %v1746 = vsub.s32 0, %v1745
        %v1747 = vrot.slane %v1741, %v1746
        %v1748 = vmul.f32 %v431, %v1747
        %v1749 = vmul.f32 %v434, %v1747
        %v1750 = vadd.f32 %v1667, %v1748
        %v1751 = vadd.f32 %v1668, %v1749
        %v1752 = vld [vmem:[%s8] sm:$0x1]
        %v1754 = vlaneseq
        %v1755 = vshrl.u32 %v1754, 7
        %v1756 = vsub.s32 0, %v1755
        %v1757 = vrot.slane %v1752, %v1756
        %v1759 = vadd.f32 %v1750, %v1757
        %v1760 = vadd.f32 %v1751, %v1757
        %v1761 = vmax.f32 %v1759, 0.0
        %v1762 = vmax.f32 %v1760, 0.0
        %1763 = vst.msk [vmem:[%s393] sm:$0xff] %vm1246, %v1761
        %1764 = vst.msk [vmem:[%s393 + $0x8] sm:$0xff] %vm1246, %v1762
        %s1765 = sand.u32 %s239, 1
        %s1766 = scalar_lea.sflag [#allocation4], %s1765
        %s1767 = sand.u32 %s239, 1
        %s1768 = smul.addr %s1767, 16
        %s1769 = scalar_lea.vmem [#allocation7], %s1768
        // Predicated region
        $region65: #{tpu_custom_call.1} parent=55 // pred_check
          %p1770 = pneg %p249
        $region66: #{tpu_custom_call.1} parent=55 // pred_check_branch
          %1772 = sbr.rel (%p1770) target = $region68
        $region67: #{tpu_custom_call.1} parent=55 // pred_region
          %s1774 = ssub.s32 256, 256
          %1775 = vsyncadd %s1766, %s1774
          %s1776 = smul.addr %s27, 2
          %s1777 = smul.addr %s1776, 128
          %s1778 = scalar_lea.hbm %s9, %s1777
          %s1779 = sshll.u32 %s1769, 4
          %s1780 = int_to_ptr.vmem [resolvable:$true] %s1779
          %1785 = dma.vmem_to_hbm [thread:$0]  %s1780, 256, %s1778, %s1766, 128, 128, 8
        $region68: #{tpu_custom_call.1} parent=55 // pred_fallthru
          _
      $region56: #{tpu_custom_call.1} parent=5 // pred_fallthru
        _
      %p1786 = scmp.le.s32.totalorder 2, %s22
      // Predicated region
      $region69: #{tpu_custom_call.1} parent=5 // pred_check
        %p1787 = pneg %p1786
      $region70: #{tpu_custom_call.1} parent=5 // pred_check_branch
        %1789 = sbr.rel (%p1787) target = $region72
      $region71: #{tpu_custom_call.1} parent=5 // pred_region
        %s1790 = ssub.s32 %s22, 2
        // Predicated region
        $region73: #{tpu_custom_call.1} parent=71 // pred_check
          %p1791 = pneg %p255
        $region74: #{tpu_custom_call.1} parent=71 // pred_check_branch
          %1793 = sbr.rel (%p1791) target = $region76
        $region75: #{tpu_custom_call.1} parent=71 // pred_region
          %s1794 = sand.u32 %s240, 1
          %s1795 = scalar_lea.sflag [#allocation4], %s1794
          %s1796 = sand.u32 %s240, 1
          %s1797 = smul.addr %s1796, 16
          %s1798 = scalar_lea.vmem [#allocation7], %s1797
          %1799 = dma.done %s1795, 256
        $region76: #{tpu_custom_call.1} parent=71 // pred_fallthru
          _
      $region72: #{tpu_custom_call.1} parent=5 // pred_fallthru
        _
    $region6: #{tpu_custom_call.1} parent=1 // loop_footer
      %s26 = sadd.s32 1, %s22
    $region7: #{tpu_custom_call.1} parent=1 // loop_footer_branch
      %21 = sbr.rel target = $region3
    $region8: #{tpu_custom_call.1} parent=1 // loop_exit
      _
    %1800 = vsyncpa [#allocation3], 1
    %s1801 = scalar_lea.sflag [#allocation3], 1
    %1802 = vsyncpa %s1801, 1
    %1803 = vsyncpa [#allocation6], 1
    %1804 = vsyncpa [#allocation4], 1
    %s1805 = scalar_lea.sflag [#allocation4], 1
    %1806 = vsyncpa %s1805, 1

</llo_original>
